<compile_context>
chip_gen: v7x
topology: tpu7x:2x2x1
jax: 0.10.0
libtpu: 0.0.40
codegen_flags: <defaults>
</compile_context>

<pallas_src>
import functools

import jax
import jax.numpy as jnp
from jax import lax
from jax.experimental import pallas as pl
from jax.experimental.pallas import tpu as pltpu


# ----------------------------------------------------------------------------
# Helpers: padding + tile selection.
# ----------------------------------------------------------------------------
def _round_up(x, m):
    return ((x + m - 1) // m) * m


def _padded_size(dim):
    """Lane-friendly padded size (multiple of 128). Guarantees the (8,128)
    BlockSpec constraint and unmasked vector stores for all kernels below."""
    return _round_up(max(dim, 1), 128)


def _pick_tile(dim, target):
    """Largest multiple-of-128 tile <= target that divides dim (or dim itself)."""
    if dim <= target:
        return dim
    if dim % 128 == 0:
        for t in range(target - target % 128, 127, -128):
            if dim % t == 0:
                return t
    return dim  # robustness fallback; unreachable once dims are padded


def _pad_last(a, size):
    """Zero-pad the last axis of `a` up to `size`."""
    pad = size - a.shape[-1]
    if pad == 0:
        return a
    cfg = [(0, 0)] * (a.ndim - 1) + [(0, pad)]
    return jnp.pad(a, cfg)


# ----------------------------------------------------------------------------
# Kernel 1: forward Vandermonde transform
#   x (Cin, tk) bf16  @  Vt (tk, tj) bf16  ->  out (Cin, tj) f32
#   grid = (B, col tiles over 2*mt, k tiles over N); contraction axis last.
#   The output block index ignores k -> it stays resident in VMEM and is used
#   directly as the f32 accumulator (no scratch, no extra copy).
# ----------------------------------------------------------------------------
def _fwd_transform_kernel(x_ref, vt_ref, out_ref):
    @pl.when(pl.program_id(2) == 0)
    def _():
        out_ref[...] = jnp.zeros_like(out_ref)

    out_ref[...] += jnp.dot(x_ref[...], vt_ref[...],
                            preferred_element_type=jnp.float32)


def fwd_transform(x_bf16, vt_stack):
    B, cin, n_p = x_bf16.shape
    k2_p = vt_stack.shape[-1]                 # padded 2*mt
    tk = _pick_tile(n_p, 1024)                # contraction tile (points)
    tj = _pick_tile(k2_p, 512)                # output lane tile (modes)
    grid = (B, k2_p // tj, n_p // tk)
    return pl.pallas_call(
        _fwd_transform_kernel,
        out_shape=jax.ShapeDtypeStruct((B, cin, k2_p), jnp.float32),
        grid_spec=pltpu.PrefetchScalarGridSpec(
            num_scalar_prefetch=0,
            grid=grid,
            in_specs=[
                pl.BlockSpec((None, cin, tk), lambda b, j, k: (b, 0, k)),
                pl.BlockSpec((None, tk, tj), lambda b, j, k: (b, k, j)),
            ],
            out_specs=pl.BlockSpec((None, cin, tj), lambda b, j, k: (b, 0, j))),
        compiler_params=pltpu.CompilerParams(
            dimension_semantics=("parallel", "parallel", "arbitrary"),
            vmem_limit_bytes=32 * 1024 * 1024),
    )(x_bf16, vt_stack)


# ----------------------------------------------------------------------------
# Kernel 2: complex spectral multiply (both corners, all batches, tiled).
#   x : (B, Cin, M2p) bf16      w : (Cin, Cout, M2p) bf16
#   out[b, o, m] = sum_i x[b, i, m] * w[i, o, m]     (complex, split re/im)
#   grid = (B, Cout tiles, mode tiles), all "parallel"; the Cin reduction stays
#   inside the block so the (tcout, tmode) f32 accumulators live in vregs.
# ----------------------------------------------------------------------------
def _spectral_mul_kernel(xr_ref, xi_ref, wr_ref, wi_ref, or_ref, oi_ref):
    cin = xr_ref.shape[0]
    accr = jnp.zeros(or_ref.shape, jnp.float32)
    acci = jnp.zeros(oi_ref.shape, jnp.float32)

    def step(i, accr, acci):
        xr = xr_ref[i].astype(jnp.float32)[None, :]   # (1, tmode)
        xi = xi_ref[i].astype(jnp.float32)[None, :]
        wr = wr_ref[i].astype(jnp.float32)             # (tcout, tmode)
        wi = wi_ref[i].astype(jnp.float32)
        accr = accr + (xr * wr - xi * wi)
        acci = acci + (xr * wi + xi * wr)
        return accr, acci

    if cin <= 8:
        for i in range(cin):                           # static unroll (tiny Cin)
            accr, acci = step(i, accr, acci)
    else:                                              # realistic Cin: bounded code size
        accr, acci = lax.fori_loop(0, cin, lambda i, c: step(i, *c),
                                   (accr, acci), unroll=4)

    or_ref[...] = accr
    oi_ref[...] = acci


def spectral_mul(xr, xi, wr, wi):
    B, cin, m2_p = xr.shape
    cout = wr.shape[1]
    # Cout sub-tile keeps the two f32 accumulators comfortably inside 64 vregs.
    if cout <= 32:
        tcout = cout
    elif cout % 16 == 0:
        tcout = 16
    elif cout % 8 == 0:
        tcout = 8
    else:
        tcout = cout
    tmode = _pick_tile(m2_p, 512)
    grid = (B, cout // tcout, m2_p // tmode)
    return pl.pallas_call(
        _spectral_mul_kernel,
        out_shape=(jax.ShapeDtypeStruct((B, cout, m2_p), jnp.float32),
                   jax.ShapeDtypeStruct((B, cout, m2_p), jnp.float32)),
        grid_spec=pltpu.PrefetchScalarGridSpec(
            num_scalar_prefetch=0,
            grid=grid,
            in_specs=[
                pl.BlockSpec((None, cin, tmode), lambda b, co, mo: (b, 0, mo)),
                pl.BlockSpec((None, cin, tmode), lambda b, co, mo: (b, 0, mo)),
                pl.BlockSpec((cin, tcout, tmode), lambda b, co, mo: (0, co, mo)),
                pl.BlockSpec((cin, tcout, tmode), lambda b, co, mo: (0, co, mo)),
            ],
            out_specs=(
                pl.BlockSpec((None, tcout, tmode), lambda b, co, mo: (b, co, mo)),
                pl.BlockSpec((None, tcout, tmode), lambda b, co, mo: (b, co, mo)),
            )),
        compiler_params=pltpu.CompilerParams(
            dimension_semantics=("parallel", "parallel", "parallel"),
            vmem_limit_bytes=32 * 1024 * 1024),
    )(xr, xi, wr, wi)


# ----------------------------------------------------------------------------
# Kernel 3: inverse transform (real part only), 2/N scale fused in.
#   xf (Cout, tk) bf16  @  V (tk, tn) bf16  ->  out (Cout, tn) f32
#   V is stacked [cos ; -sin] along the contraction axis, xf is [re | im],
#   so a single bf16 x bf16 MXU dot yields the real part of the inverse.
# ----------------------------------------------------------------------------
def _inv_transform_kernel(xf_ref, v_ref, out_ref, *, scale):
    k = pl.program_id(2)

    @pl.when(k == 0)
    def _():
        out_ref[...] = jnp.zeros_like(out_ref)

    out_ref[...] += jnp.dot(xf_ref[...], v_ref[...],
                            preferred_element_type=jnp.float32)

    @pl.when(k == pl.num_programs(2) - 1)
    def _():
        out_ref[...] = out_ref[...] * scale


def inv_transform(xf_bf16, v_stack, scale):
    B, cout, k2_p = xf_bf16.shape              # padded 2*mt
    n_p = v_stack.shape[-1]                    # padded N
    tk = _pick_tile(k2_p, 1024)                # contraction tile (modes)
    tn = _pick_tile(n_p, 512)                  # output lane tile (points)
    grid = (B, n_p // tn, k2_p // tk)
    kernel = functools.partial(_inv_transform_kernel, scale=scale)
    return pl.pallas_call(
        kernel,
        out_shape=jax.ShapeDtypeStruct((B, cout, n_p), jnp.float32),
        grid_spec=pltpu.PrefetchScalarGridSpec(
            num_scalar_prefetch=0,
            grid=grid,
            in_specs=[
                pl.BlockSpec((None, cout, tk), lambda b, j, k: (b, 0, k)),
                pl.BlockSpec((None, tk, tn), lambda b, j, k: (b, k, j)),
            ],
            out_specs=pl.BlockSpec((None, cout, tn), lambda b, j, k: (b, 0, j))),
        compiler_params=pltpu.CompilerParams(
            dimension_semantics=("parallel", "parallel", "arbitrary"),
            vmem_limit_bytes=32 * 1024 * 1024),
    )(xf_bf16, v_stack)


# ----------------------------------------------------------------------------
# Transformer (VFT) construction -- plain-JAX setup/glue.  Both layouts are
# zero-padded so the point axis and stacked mode axis are multiples of 128.
#   Vt_stack : (B, Np, K2p) = [cos | -sin] along modes  (forward transform)
#   V_stack  : (B, K2p, Np) = [cos ; -sin] along modes  (inverse transform)
# ----------------------------------------------------------------------------
def build_vft(xpos, ypos, modes):
    B, n = xpos.shape
    m = modes
    mt = 2 * m * (2 * m - 1)
    n_p = _padded_size(n)
    k2_p = _padded_size(2 * mt)

    # positions scaled to [0, 6.28] exactly as in the original VFT class
    xpos = xpos - jnp.min(xpos)
    xpos = xpos * 6.28 / jnp.max(xpos)
    ypos = ypos - jnp.min(ypos)
    ypos = ypos * 6.28 / jnp.max(ypos)

    X_ = jnp.concatenate([jnp.arange(m), jnp.arange(-m, 0)]).astype(jnp.float32)
    Y_ = jnp.concatenate([jnp.arange(m), jnp.arange(-(m - 1), 0)]).astype(jnp.float32)
    kx = jnp.tile(X_, 2 * m - 1)               # (mt,)
    ky = jnp.repeat(Y_, 2 * m)                 # (mt,)

    theta = (xpos[:, :, None] * kx[None, None, :]
             + ypos[:, :, None] * ky[None, None, :])                   # (B, N, mt)
    vt = jnp.concatenate([jnp.cos(theta), -jnp.sin(theta)], axis=-1)   # (B, N, 2mt)
    vt_pad = jnp.zeros((B, n_p, k2_p), jnp.float32).at[:, :n, :2 * mt].set(vt)
    # TODO(synk): fp8 V on v7x; on-the-fly cos/sin V tiles on v5e/v6e.
    vt_stack = vt_pad.astype(jnp.bfloat16)                             # (B, Np, K2p)
    v_stack = jnp.transpose(vt_stack, (0, 2, 1))                       # (B, K2p, Np)
    return vt_stack, v_stack


# ----------------------------------------------------------------------------
# Full forward pass of SpectralConv2d_dse (glue + Pallas kernels).
# ----------------------------------------------------------------------------
@functools.partial(jax.jit, static_argnames=("modes1",))
def spectral_conv2d_dse_forward(x, wr1, wi1, wr2, wi2, vt_stack, v_stack, modes1):
    B, cin, n = x.shape
    cout = wr1.shape[1]
    m1 = modes1
    M = m1 * m1
    mt = 2 * m1 * (2 * m1 - 1)

    n_p = vt_stack.shape[1]                    # padded #points
    k2_p = vt_stack.shape[2]                   # padded 2*mt
    m2_p = _padded_size(2 * M)                 # padded 2*M (two corners)

    # --- forward Fourier transform: (B, Cin, 2*mt) = x @ [cos | -sin] ---------
    x_pad = _pad_last(x, n_p).astype(jnp.bfloat16)             # (B, Cin, Np)
    xft = fwd_transform(x_pad, vt_stack)                       # (B, Cin, K2p) f32
    # NOTE: the PyTorch module reshapes with out_channels here, which is only
    # valid when in_channels == out_channels; the actual channel count is Cin.
    xftr = xft[..., :mt].reshape(B, cin, 2 * m1, 2 * m1 - 1)
    xfti = xft[..., mt:2 * mt].reshape(B, cin, 2 * m1, 2 * m1 - 1)

    # --- spectral multiply on the two low-frequency corners (one kernel) ------
    c1r = xftr[:, :, :m1, :m1].reshape(B, cin, M)
    c1i = xfti[:, :, :m1, :m1].reshape(B, cin, M)
    c2r = xftr[:, :, -m1:, :m1].reshape(B, cin, M)
    c2i = xfti[:, :, -m1:, :m1].reshape(B, cin, M)
    xr_all = _pad_last(jnp.concatenate([c1r, c2r], -1), m2_p).astype(jnp.bfloat16)
    xi_all = _pad_last(jnp.concatenate([c1i, c2i], -1), m2_p).astype(jnp.bfloat16)
    wr_all = _pad_last(jnp.concatenate([wr1.reshape(cin, cout, M),
                                        wr2.reshape(cin, cout, M)], -1),
                       m2_p).astype(jnp.bfloat16)
    wi_all = _pad_last(jnp.concatenate([wi1.reshape(cin, cout, M),
                                        wi2.reshape(cin, cout, M)], -1),
                       m2_p).astype(jnp.bfloat16)

    o_r, o_i = spectral_mul(xr_all, xi_all, wr_all, wi_all)    # (B, Cout, M2p)
    outr = o_r[..., :2 * M]                                    # (B, Cout, 2M) = out_ft
    outi = o_i[..., :2 * M]

    # --- Hermitian mirror: x_ft2 = x_ft[..., 2*m1:].flip(-1, -2).conj() -------
    x2r = jnp.flip(outr[..., 2 * m1:], axis=(-1, -2))
    x2i = -jnp.flip(outi[..., 2 * m1:], axis=(-1, -2))
    xfr = jnp.concatenate([outr, x2r], axis=-1)                # (B, Cout, mt)
    xfi = jnp.concatenate([outi, x2i], axis=-1)
    xf = _pad_last(jnp.concatenate([xfr, xfi], axis=-1), k2_p) # (B, Cout, K2p)
    xf = xf.astype(jnp.bfloat16)    # quantize small operand; V tile stays bf16

    # --- inverse transform, real part, with fused 2/N scaling -----------------
    out = inv_transform(xf, v_stack, scale=2.0 / n)            # (B, Cout, Np)
    return out[..., :n]


# ----------------------------------------------------------------------------
# Pure-JAX complex reference (mirrors the PyTorch forward and the kernels'
# quantization points: bf16 x / V / corner activations / weights / xf, with
# f32 / complex64 accumulation).
# ----------------------------------------------------------------------------
def reference_forward(x, w1, w2, v_stack, m1, n):
    B, cin, _ = x.shape
    cout = w1.shape[1]
    mt = 2 * m1 * (2 * m1 - 1)

    def q_c(z):   # quantize a complex array's re/im parts to bf16
        return (z.real.astype(jnp.bfloat16).astype(jnp.float32)
                + 1j * z.imag.astype(jnp.bfloat16).astype(jnp.float32)
                ).astype(jnp.complex64)

    Vf = (v_stack[:, :mt, :n].astype(jnp.float32)
          + 1j * v_stack[:, mt:2 * mt, :n].astype(jnp.float32)).astype(jnp.complex64)
    xq = x.astype(jnp.bfloat16).astype(jnp.float32).astype(jnp.complex64)

    xft = jnp.einsum('bmn,bcn->bcm', Vf, xq)                   # (B, Cin, mt)
    xft = xft.reshape(B, cin, 2 * m1, 2 * m1 - 1)
    out_ft = jnp.zeros((B, cout, 2 * m1, m1), jnp.complex64)
    out_ft = out_ft.at[:, :, :m1, :m1].set(
        jnp.einsum('bixy,ioxy->boxy', q_c(xft[:, :, :m1, :m1]), q_c(w1)))
    out_ft = out_ft.at[:, :, -m1:, :m1].set(
        jnp.einsum('bixy,ioxy->boxy', q_c(xft[:, :, -m1:, :m1]), q_c(w2)))
    xf = out_ft.reshape(B, cout, 2 * m1 * m1)
    xf2 = jnp.conj(jnp.flip(xf[..., 2 * m1:], axis=(-1, -2)))
    xf = q_c(jnp.concatenate([xf, xf2], axis=-1))              # (B, Cout, mt)
    Vinv = jnp.conj(jnp.transpose(Vf, (0, 2, 1)))              # (B, N, mt)
    out = jnp.einsum('bnm,bcm->bcn', Vinv, xf)
    return jnp.real(out) / n * 2


if __name__ == "__main__":
    B, Cin, Cout, m1, N = 2, 4, 4, 4, 16
    scale = 1.0 / (Cin * Cout)

    key = jax.random.PRNGKey(0)
    k1, k2, k3, k4, k5, k6, k7 = jax.random.split(key, 7)

    # nn.Parameter(scale * torch.rand(Cin, Cout, m1, m1, dtype=cfloat))
    wr1 = scale * jax.random.uniform(k1, (Cin, Cout, m1, m1), jnp.float32)
    wi1 = scale * jax.random.uniform(k2, (Cin, Cout, m1, m1), jnp.float32)
    wr2 = scale * jax.random.uniform(k3, (Cin, Cout, m1, m1), jnp.float32)
    wi2 = scale * jax.random.uniform(k4, (Cin, Cout, m1, m1), jnp.float32)

    # input x: (B, C, N) and non-equispaced point positions
    x = jax.random.normal(k5, (B, Cin, N), jnp.float32)
    xpos = jax.random.uniform(k6, (B, N), jnp.float32)
    ypos = jax.random.uniform(k7, (B, N), jnp.float32)

    Vt_stack, V_stack = build_vft(xpos, ypos, m1)   # bf16, lane-padded, both layouts

    out = spectral_conv2d_dse_forward(x, wr1, wi1, wr2, wi2, Vt_stack, V_stack, m1)
    out = jax.block_until_ready(out)

    ref = reference_forward(x, (wr1 + 1j * wi1).astype(jnp.complex64),
                            (wr2 + 1j * wi2).astype(jnp.complex64), V_stack, m1, N)
    assert out.shape == (B, Cout, N)
    err = float(jnp.max(jnp.abs(out - ref)))
    assert jnp.allclose(out, ref, rtol=2e-3, atol=2e-3), f"max abs err {err}"

    print("KERNEL_OK")
</pallas_src>

<mosaic_0001>
module attributes {stable_mosaic.version = 11 : i64} {
  func.func @_fwd_transform_kernel(%arg0: i32, %arg1: i32, %arg2: i32, %arg3: memref<1x4x128xbf16, #tpu.memory_space<vmem>>, %arg4: memref<1x128x128xbf16, #tpu.memory_space<vmem>>, %arg5: memref<1x4x128xf32, #tpu.memory_space<vmem>>) attributes {dimension_semantics = [#tpu.dimension_semantics<parallel>, #tpu.dimension_semantics<parallel>, #tpu.dimension_semantics<arbitrary>], iteration_bounds = array<i64: 2, 1, 1>, scalar_prefetch = 0 : i64, scratch_operands = 0 : i64, tpu.core_type = #tpu.core_type<tc>, window_params = [{transform_indices = @transform_0, window_bounds = array<i64: 1, 4, 128>}, {transform_indices = @transform_1, window_bounds = array<i64: 1, 128, 128>}, {transform_indices = @transform_2, window_bounds = array<i64: 1, 4, 128>}]} {
    %c0_i32 = arith.constant 0 : i32
    %0 = arith.cmpi eq, %arg2, %c0_i32 : i32
    %1 = arith.extui %0 : i1 to i32
    %c0_i32_0 = arith.constant 0 : i32
    %2 = arith.cmpi ne, %1, %c0_i32_0 : i32
    scf.if %2 {
      %cst_12 = arith.constant 0.000000e+00 : f32
      %14 = vector.broadcast %cst_12 : f32 to vector<4x128xf32>
      %c0_13 = arith.constant 0 : index
      %c0_14 = arith.constant 0 : index
      %c0_15 = arith.constant 0 : index
      %15 = vector.load %arg5[%c0_13, %c0_14, %c0_15] : memref<1x4x128xf32, #tpu.memory_space<vmem>>, vector<1x4x128xf32>
      %16 = vector.shape_cast %15 : vector<1x4x128xf32> to vector<4x128xf32>
      %17 = vector.shape_cast %14 : vector<4x128xf32> to vector<1x4x128xf32>
      tpu.vector_store %arg5[%c0_13, %c0_14, %c0_15], %17 {strides = array<i32>} : memref<1x4x128xf32, #tpu.memory_space<vmem>>, vector<1x4x128xf32>,
    } else {
    }
    %c0 = arith.constant 0 : index
    %c0_1 = arith.constant 0 : index
    %c0_2 = arith.constant 0 : index
    %3 = vector.load %arg5[%c0, %c0_1, %c0_2] : memref<1x4x128xf32, #tpu.memory_space<vmem>>, vector<1x4x128xf32>
    %4 = vector.shape_cast %3 : vector<1x4x128xf32> to vector<4x128xf32>
    %c0_3 = arith.constant 0 : index
    %c0_4 = arith.constant 0 : index
    %c0_5 = arith.constant 0 : index
    %5 = vector.load %arg3[%c0_3, %c0_4, %c0_5] : memref<1x4x128xbf16, #tpu.memory_space<vmem>>, vector<1x4x128xbf16>
    %6 = vector.shape_cast %5 : vector<1x4x128xbf16> to vector<4x128xbf16>
    %c0_6 = arith.constant 0 : index
    %c0_7 = arith.constant 0 : index
    %c0_8 = arith.constant 0 : index
    %7 = vector.load %arg4[%c0_6, %c0_7, %c0_8] : memref<1x128x128xbf16, #tpu.memory_space<vmem>>, vector<1x128x128xbf16>
    %8 = vector.shape_cast %7 : vector<1x128x128xbf16> to vector<128x128xbf16>
    %cst = arith.constant dense<0.000000e+00> : vector<4x128xf32>
    %9 = tpu.matmul %6, %8, %cst {dimension_numbers = #tpu.dot_dimension_numbers<[1], [0], [0], [1], [0, 0, 1, 1], [], []>} : vector<4x128xbf16>, vector<128x128xbf16>, vector<4x128xf32> -> vector<4x128xf32>
    %10 = arith.addf %4, %9 : vector<4x128xf32>
    %c0_9 = arith.constant 0 : index
    %c0_10 = arith.constant 0 : index
    %c0_11 = arith.constant 0 : index
    %11 = vector.load %arg5[%c0_9, %c0_10, %c0_11] : memref<1x4x128xf32, #tpu.memory_space<vmem>>, vector<1x4x128xf32>
    %12 = vector.shape_cast %11 : vector<1x4x128xf32> to vector<4x128xf32>
    %13 = vector.shape_cast %10 : vector<4x128xf32> to vector<1x4x128xf32>
    tpu.vector_store %arg5[%c0_9, %c0_10, %c0_11], %13 {strides = array<i32>} : memref<1x4x128xf32, #tpu.memory_space<vmem>>, vector<1x4x128xf32>,
    return
  }
  func.func @transform_0(%arg0: i32, %arg1: i32, %arg2: i32) -> (i32, i32, i32) {
    %c0_i32 = arith.constant 0 : i32
    %c0_i32_0 = arith.constant 0 : i32
    return %arg0, %c0_i32, %arg2 : i32, i32, i32
  }
  func.func @transform_1(%arg0: i32, %arg1: i32, %arg2: i32) -> (i32, i32, i32) {
    %c0_i32 = arith.constant 0 : i32
    return %arg0, %arg2, %arg1 : i32, i32, i32
  }
  func.func @transform_2(%arg0: i32, %arg1: i32, %arg2: i32) -> (i32, i32, i32) {
    %c0_i32 = arith.constant 0 : i32
    %c0_i32_0 = arith.constant 0 : i32
    return %arg0, %c0_i32, %arg1 : i32, i32, i32
  }
}

module attributes {stable_mosaic.version = 11 : i64} {
  func.func @_spectral_mul_kernel(%arg0: i32, %arg1: i32, %arg2: i32, %arg3: memref<1x4x128xbf16, #tpu.memory_space<vmem>>, %arg4: memref<1x4x128xbf16, #tpu.memory_space<vmem>>, %arg5: memref<4x4x128xbf16, #tpu.memory_space<vmem>>, %arg6: memref<4x4x128xbf16, #tpu.memory_space<vmem>>, %arg7: memref<1x4x128xf32, #tpu.memory_space<vmem>>, %arg8: memref<1x4x128xf32, #tpu.memory_space<vmem>>) attributes {dimension_semantics = [#tpu.dimension_semantics<parallel>, #tpu.dimension_semantics<parallel>, #tpu.dimension_semantics<parallel>], iteration_bounds = array<i64: 2, 1, 1>, scalar_prefetch = 0 : i64, scratch_operands = 0 : i64, tpu.core_type = #tpu.core_type<tc>, window_params = [{transform_indices = @transform_0, window_bounds = array<i64: 1, 4, 128>}, {transform_indices = @transform_1, window_bounds = array<i64: 1, 4, 128>}, {transform_indices = @transform_2, window_bounds = array<i64: 4, 4, 128>}, {transform_indices = @transform_3, window_bounds = array<i64: 4, 4, 128>}, {transform_indices = @transform_4, window_bounds = array<i64: 1, 4, 128>}, {transform_indices = @transform_5, window_bounds = array<i64: 1, 4, 128>}]} {
    %cst = arith.constant 0.000000e+00 : f32
    %0 = vector.broadcast %cst : f32 to vector<4x128xf32>
    %cst_0 = arith.constant 0.000000e+00 : f32
    %1 = vector.broadcast %cst_0 : f32 to vector<4x128xf32>
    %c0 = arith.constant 0 : index
    %c0_1 = arith.constant 0 : index
    %c0_2 = arith.constant 0 : index
    %2 = vector.load %arg3[%c0, %c0_1, %c0_2] : memref<1x4x128xbf16, #tpu.memory_space<vmem>>, vector<1x1x128xbf16>
    %3 = vector.shape_cast %2 : vector<1x1x128xbf16> to vector<128xbf16>
    %4 = arith.extf %3 : vector<128xbf16> to vector<128xf32>
    %5 = vector.shape_cast %4 : vector<128xf32> to vector<1x128xf32>
    %c0_3 = arith.constant 0 : index
    %c0_4 = arith.constant 0 : index
    %c0_5 = arith.constant 0 : index
    %6 = vector.load %arg4[%c0_3, %c0_4, %c0_5] : memref<1x4x128xbf16, #tpu.memory_space<vmem>>, vector<1x1x128xbf16>
    %7 = vector.shape_cast %6 : vector<1x1x128xbf16> to vector<128xbf16>
    %8 = arith.extf %7 : vector<128xbf16> to vector<128xf32>
    %9 = vector.shape_cast %8 : vector<128xf32> to vector<1x128xf32>
    %c0_6 = arith.constant 0 : index
    %c0_7 = arith.constant 0 : index
    %c0_8 = arith.constant 0 : index
    %10 = vector.load %arg5[%c0_6, %c0_7, %c0_8] : memref<4x4x128xbf16, #tpu.memory_space<vmem>>, vector<1x4x128xbf16>
    %11 = vector.shape_cast %10 : vector<1x4x128xbf16> to vector<4x128xbf16>
    %12 = arith.extf %11 : vector<4x128xbf16> to vector<4x128xf32>
    %c0_9 = arith.constant 0 : index
    %c0_10 = arith.constant 0 : index
    %c0_11 = arith.constant 0 : index
    %13 = vector.load %arg6[%c0_9, %c0_10, %c0_11] : memref<4x4x128xbf16, #tpu.memory_space<vmem>>, vector<1x4x128xbf16>
    %14 = vector.shape_cast %13 : vector<1x4x128xbf16> to vector<4x128xbf16>
    %15 = arith.extf %14 : vector<4x128xbf16> to vector<4x128xf32>
    %16 = vector.broadcast %5 : vector<1x128xf32> to vector<4x128xf32>
    %17 = arith.mulf %16, %12 : vector<4x128xf32>
    %18 = vector.broadcast %9 : vector<1x128xf32> to vector<4x128xf32>
    %19 = arith.mulf %18, %15 : vector<4x128xf32>
    %20 = arith.subf %17, %19 : vector<4x128xf32>
    %21 = arith.addf %0, %20 : vector<4x128xf32>
    %22 = vector.broadcast %5 : vector<1x128xf32> to vector<4x128xf32>
    %23 = arith.mulf %22, %15 : vector<4x128xf32>
    %24 = vector.broadcast %9 : vector<1x128xf32> to vector<4x128xf32>
    %25 = arith.mulf %24, %12 : vector<4x128xf32>
    %26 = arith.addf %23, %25 : vector<4x128xf32>
    %27 = arith.addf %1, %26 : vector<4x128xf32>
    %c0_12 = arith.constant 0 : index
    %c1 = arith.constant 1 : index
    %c0_13 = arith.constant 0 : index
    %28 = vector.load %arg3[%c0_12, %c1, %c0_13] : memref<1x4x128xbf16, #tpu.memory_space<vmem>>, vector<1x1x128xbf16>
    %29 = vector.shape_cast %28 : vector<1x1x128xbf16> to vector<128xbf16>
    %30 = arith.extf %29 : vector<128xbf16> to vector<128xf32>
    %31 = vector.shape_cast %30 : vector<128xf32> to vector<1x128xf32>
    %c0_14 = arith.constant 0 : index
    %c1_15 = arith.constant 1 : index
    %c0_16 = arith.constant 0 : index
    %32 = vector.load %arg4[%c0_14, %c1_15, %c0_16] : memref<1x4x128xbf16, #tpu.memory_space<vmem>>, vector<1x1x128xbf16>
    %33 = vector.shape_cast %32 : vector<1x1x128xbf16> to vector<128xbf16>
    %34 = arith.extf %33 : vector<128xbf16> to vector<128xf32>
    %35 = vector.shape_cast %34 : vector<128xf32> to vector<1x128xf32>
    %c1_17 = arith.constant 1 : index
    %c0_18 = arith.constant 0 : index
    %c0_19 = arith.constant 0 : index
    %36 = vector.load %arg5[%c1_17, %c0_18, %c0_19] : memref<4x4x128xbf16, #tpu.memory_space<vmem>>, vector<1x4x128xbf16>
    %37 = vector.shape_cast %36 : vector<1x4x128xbf16> to vector<4x128xbf16>
    %38 = arith.extf %37 : vector<4x128xbf16> to vector<4x128xf32>
    %c1_20 = arith.constant 1 : index
    %c0_21 = arith.constant 0 : index
    %c0_22 = arith.constant 0 : index
    %39 = vector.load %arg6[%c1_20, %c0_21, %c0_22] : memref<4x4x128xbf16, #tpu.memory_space<vmem>>, vector<1x4x128xbf16>
    %40 = vector.shape_cast %39 : vector<1x4x128xbf16> to vector<4x128xbf16>
    %41 = arith.extf %40 : vector<4x128xbf16> to vector<4x128xf32>
    %42 = vector.broadcast %31 : vector<1x128xf32> to vector<4x128xf32>
    %43 = arith.mulf %42, %38 : vector<4x128xf32>
    %44 = vector.broadcast %35 : vector<1x128xf32> to vector<4x128xf32>
    %45 = arith.mulf %44, %41 : vector<4x128xf32>
    %46 = arith.subf %43, %45 : vector<4x128xf32>
    %47 = arith.addf %21, %46 : vector<4x128xf32>
    %48 = vector.broadcast %31 : vector<1x128xf32> to vector<4x128xf32>
    %49 = arith.mulf %48, %41 : vector<4x128xf32>
    %50 = vector.broadcast %35 : vector<1x128xf32> to vector<4x128xf32>
    %51 = arith.mulf %50, %38 : vector<4x128xf32>
    %52 = arith.addf %49, %51 : vector<4x128xf32>
    %53 = arith.addf %27, %52 : vector<4x128xf32>
    %c0_23 = arith.constant 0 : index
    %c2 = arith.constant 2 : index
    %c0_24 = arith.constant 0 : index
    %54 = vector.load %arg3[%c0_23, %c2, %c0_24] : memref<1x4x128xbf16, #tpu.memory_space<vmem>>, vector<1x1x128xbf16>
    %55 = vector.shape_cast %54 : vector<1x1x128xbf16> to vector<128xbf16>
    %56 = arith.extf %55 : vector<128xbf16> to vector<128xf32>
    %57 = vector.shape_cast %56 : vector<128xf32> to vector<1x128xf32>
    %c0_25 = arith.constant 0 : index
    %c2_26 = arith.constant 2 : index
    %c0_27 = arith.constant 0 : index
    %58 = vector.load %arg4[%c0_25, %c2_26, %c0_27] : memref<1x4x128xbf16, #tpu.memory_space<vmem>>, vector<1x1x128xbf16>
    %59 = vector.shape_cast %58 : vector<1x1x128xbf16> to vector<128xbf16>
    %60 = arith.extf %59 : vector<128xbf16> to vector<128xf32>
    %61 = vector.shape_cast %60 : vector<128xf32> to vector<1x128xf32>
    %c2_28 = arith.constant 2 : index
    %c0_29 = arith.constant 0 : index
    %c0_30 = arith.constant 0 : index
    %62 = vector.load %arg5[%c2_28, %c0_29, %c0_30] : memref<4x4x128xbf16, #tpu.memory_space<vmem>>, vector<1x4x128xbf16>
    %63 = vector.shape_cast %62 : vector<1x4x128xbf16> to vector<4x128xbf16>
    %64 = arith.extf %63 : vector<4x128xbf16> to vector<4x128xf32>
    %c2_31 = arith.constant 2 : index
    %c0_32 = arith.constant 0 : index
    %c0_33 = arith.constant 0 : index
    %65 = vector.load %arg6[%c2_31, %c0_32, %c0_33] : memref<4x4x128xbf16, #tpu.memory_space<vmem>>, vector<1x4x128xbf16>
    %66 = vector.shape_cast %65 : vector<1x4x128xbf16> to vector<4x128xbf16>
    %67 = arith.extf %66 : vector<4x128xbf16> to vector<4x128xf32>
    %68 = vector.broadcast %57 : vector<1x128xf32> to vector<4x128xf32>
    %69 = arith.mulf %68, %64 : vector<4x128xf32>
    %70 = vector.broadcast %61 : vector<1x128xf32> to vector<4x128xf32>
    %71 = arith.mulf %70, %67 : vector<4x128xf32>
    %72 = arith.subf %69, %71 : vector<4x128xf32>
    %73 = arith.addf %47, %72 : vector<4x128xf32>
    %74 = vector.broadcast %57 : vector<1x128xf32> to vector<4x128xf32>
    %75 = arith.mulf %74, %67 : vector<4x128xf32>
    %76 = vector.broadcast %61 : vector<1x128xf32> to vector<4x128xf32>
    %77 = arith.mulf %76, %64 : vector<4x128xf32>
    %78 = arith.addf %75, %77 : vector<4x128xf32>
    %79 = arith.addf %53, %78 : vector<4x128xf32>
    %c0_34 = arith.constant 0 : index
    %c3 = arith.constant 3 : index
    %c0_35 = arith.constant 0 : index
    %80 = vector.load %arg3[%c0_34, %c3, %c0_35] : memref<1x4x128xbf16, #tpu.memory_space<vmem>>, vector<1x1x128xbf16>
    %81 = vector.shape_cast %80 : vector<1x1x128xbf16> to vector<128xbf16>
    %82 = arith.extf %81 : vector<128xbf16> to vector<128xf32>
    %83 = vector.shape_cast %82 : vector<128xf32> to vector<1x128xf32>
    %c0_36 = arith.constant 0 : index
    %c3_37 = arith.constant 3 : index
    %c0_38 = arith.constant 0 : index
    %84 = vector.load %arg4[%c0_36, %c3_37, %c0_38] : memref<1x4x128xbf16, #tpu.memory_space<vmem>>, vector<1x1x128xbf16>
    %85 = vector.shape_cast %84 : vector<1x1x128xbf16> to vector<128xbf16>
    %86 = arith.extf %85 : vector<128xbf16> to vector<128xf32>
    %87 = vector.shape_cast %86 : vector<128xf32> to vector<1x128xf32>
    %c3_39 = arith.constant 3 : index
    %c0_40 = arith.constant 0 : index
    %c0_41 = arith.constant 0 : index
    %88 = vector.load %arg5[%c3_39, %c0_40, %c0_41] : memref<4x4x128xbf16, #tpu.memory_space<vmem>>, vector<1x4x128xbf16>
    %89 = vector.shape_cast %88 : vector<1x4x128xbf16> to vector<4x128xbf16>
    %90 = arith.extf %89 : vector<4x128xbf16> to vector<4x128xf32>
    %c3_42 = arith.constant 3 : index
    %c0_43 = arith.constant 0 : index
    %c0_44 = arith.constant 0 : index
    %91 = vector.load %arg6[%c3_42, %c0_43, %c0_44] : memref<4x4x128xbf16, #tpu.memory_space<vmem>>, vector<1x4x128xbf16>
    %92 = vector.shape_cast %91 : vector<1x4x128xbf16> to vector<4x128xbf16>
    %93 = arith.extf %92 : vector<4x128xbf16> to vector<4x128xf32>
    %94 = vector.broadcast %83 : vector<1x128xf32> to vector<4x128xf32>
    %95 = arith.mulf %94, %90 : vector<4x128xf32>
    %96 = vector.broadcast %87 : vector<1x128xf32> to vector<4x128xf32>
    %97 = arith.mulf %96, %93 : vector<4x128xf32>
    %98 = arith.subf %95, %97 : vector<4x128xf32>
    %99 = arith.addf %73, %98 : vector<4x128xf32>
    %100 = vector.broadcast %83 : vector<1x128xf32> to vector<4x128xf32>
    %101 = arith.mulf %100, %93 : vector<4x128xf32>
    %102 = vector.broadcast %87 : vector<1x128xf32> to vector<4x128xf32>
    %103 = arith.mulf %102, %90 : vector<4x128xf32>
    %104 = arith.addf %101, %103 : vector<4x128xf32>
    %105 = arith.addf %79, %104 : vector<4x128xf32>
    %c0_45 = arith.constant 0 : index
    %c0_46 = arith.constant 0 : index
    %c0_47 = arith.constant 0 : index
    %106 = vector.load %arg7[%c0_45, %c0_46, %c0_47] : memref<1x4x128xf32, #tpu.memory_space<vmem>>, vector<1x4x128xf32>
    %107 = vector.shape_cast %106 : vector<1x4x128xf32> to vector<4x128xf32>
    %108 = vector.shape_cast %99 : vector<4x128xf32> to vector<1x4x128xf32>
    tpu.vector_store %arg7[%c0_45, %c0_46, %c0_47], %108 {strides = array<i32>} : memref<1x4x128xf32, #tpu.memory_space<vmem>>, vector<1x4x128xf32>,
    %c0_48 = arith.constant 0 : index
    %c0_49 = arith.constant 0 : index
    %c0_50 = arith.constant 0 : index
    %109 = vector.load %arg8[%c0_48, %c0_49, %c0_50] : memref<1x4x128xf32, #tpu.memory_space<vmem>>, vector<1x4x128xf32>
    %110 = vector.shape_cast %109 : vector<1x4x128xf32> to vector<4x128xf32>
    %111 = vector.shape_cast %105 : vector<4x128xf32> to vector<1x4x128xf32>
    tpu.vector_store %arg8[%c0_48, %c0_49, %c0_50], %111 {strides = array<i32>} : memref<1x4x128xf32, #tpu.memory_space<vmem>>, vector<1x4x128xf32>,
    return
  }
  func.func @transform_0(%arg0: i32, %arg1: i32, %arg2: i32) -> (i32, i32, i32) {
    %c0_i32 = arith.constant 0 : i32
    %c0_i32_0 = arith.constant 0 : i32
    return %arg0, %c0_i32, %arg2 : i32, i32, i32
  }
  func.func @transform_1(%arg0: i32, %arg1: i32, %arg2: i32) -> (i32, i32, i32) {
    %c0_i32 = arith.constant 0 : i32
    %c0_i32_0 = arith.constant 0 : i32
    return %arg0, %c0_i32, %arg2 : i32, i32, i32
  }
  func.func @transform_2(%arg0: i32, %arg1: i32, %arg2: i32) -> (i32, i32, i32) {
    %c0_i32 = arith.constant 0 : i32
    %c0_i32_0 = arith.constant 0 : i32
    return %c0_i32, %arg1, %arg2 : i32, i32, i32
  }
  func.func @transform_3(%arg0: i32, %arg1: i32, %arg2: i32) -> (i32, i32, i32) {
    %c0_i32 = arith.constant 0 : i32
    %c0_i32_0 = arith.constant 0 : i32
    return %c0_i32, %arg1, %arg2 : i32, i32, i32
  }
  func.func @transform_4(%arg0: i32, %arg1: i32, %arg2: i32) -> (i32, i32, i32) {
    %c0_i32 = arith.constant 0 : i32
    return %arg0, %arg1, %arg2 : i32, i32, i32
  }
  func.func @transform_5(%arg0: i32, %arg1: i32, %arg2: i32) -> (i32, i32, i32) {
    %c0_i32 = arith.constant 0 : i32
    return %arg0, %arg1, %arg2 : i32, i32, i32
  }
}

module attributes {stable_mosaic.version = 11 : i64} {
  func.func @_inv_transform_kernel(%arg0: i32, %arg1: i32, %arg2: i32, %arg3: memref<1x4x128xbf16, #tpu.memory_space<vmem>>, %arg4: memref<1x128x128xbf16, #tpu.memory_space<vmem>>, %arg5: memref<1x4x128xf32, #tpu.memory_space<vmem>>) attributes {dimension_semantics = [#tpu.dimension_semantics<parallel>, #tpu.dimension_semantics<parallel>, #tpu.dimension_semantics<arbitrary>], iteration_bounds = array<i64: 2, 1, 1>, scalar_prefetch = 0 : i64, scratch_operands = 0 : i64, tpu.core_type = #tpu.core_type<tc>, window_params = [{transform_indices = @transform_0, window_bounds = array<i64: 1, 4, 128>}, {transform_indices = @transform_1, window_bounds = array<i64: 1, 128, 128>}, {transform_indices = @transform_2, window_bounds = array<i64: 1, 4, 128>}]} {
    %c0_i32 = arith.constant 0 : i32
    %0 = arith.cmpi eq, %arg2, %c0_i32 : i32
    %1 = arith.extui %0 : i1 to i32
    %c0_i32_0 = arith.constant 0 : i32
    %2 = arith.cmpi ne, %1, %c0_i32_0 : i32
    scf.if %2 {
      %cst_14 = arith.constant 0.000000e+00 : f32
      %17 = vector.broadcast %cst_14 : f32 to vector<4x128xf32>
      %c0_15 = arith.constant 0 : index
      %c0_16 = arith.constant 0 : index
      %c0_17 = arith.constant 0 : index
      %18 = vector.load %arg5[%c0_15, %c0_16, %c0_17] : memref<1x4x128xf32, #tpu.memory_space<vmem>>, vector<1x4x128xf32>
      %19 = vector.shape_cast %18 : vector<1x4x128xf32> to vector<4x128xf32>
      %20 = vector.shape_cast %17 : vector<4x128xf32> to vector<1x4x128xf32>
      tpu.vector_store %arg5[%c0_15, %c0_16, %c0_17], %20 {strides = array<i32>} : memref<1x4x128xf32, #tpu.memory_space<vmem>>, vector<1x4x128xf32>,
    } else {
    }
    %c0 = arith.constant 0 : index
    %c0_1 = arith.constant 0 : index
    %c0_2 = arith.constant 0 : index
    %3 = vector.load %arg5[%c0, %c0_1, %c0_2] : memref<1x4x128xf32, #tpu.memory_space<vmem>>, vector<1x4x128xf32>
    %4 = vector.shape_cast %3 : vector<1x4x128xf32> to vector<4x128xf32>
    %c0_3 = arith.constant 0 : index
    %c0_4 = arith.constant 0 : index
    %c0_5 = arith.constant 0 : index
    %5 = vector.load %arg3[%c0_3, %c0_4, %c0_5] : memref<1x4x128xbf16, #tpu.memory_space<vmem>>, vector<1x4x128xbf16>
    %6 = vector.shape_cast %5 : vector<1x4x128xbf16> to vector<4x128xbf16>
    %c0_6 = arith.constant 0 : index
    %c0_7 = arith.constant 0 : index
    %c0_8 = arith.constant 0 : index
    %7 = vector.load %arg4[%c0_6, %c0_7, %c0_8] : memref<1x128x128xbf16, #tpu.memory_space<vmem>>, vector<1x128x128xbf16>
    %8 = vector.shape_cast %7 : vector<1x128x128xbf16> to vector<128x128xbf16>
    %cst = arith.constant dense<0.000000e+00> : vector<4x128xf32>
    %9 = tpu.matmul %6, %8, %cst {dimension_numbers = #tpu.dot_dimension_numbers<[1], [0], [0], [1], [0, 0, 1, 1], [], []>} : vector<4x128xbf16>, vector<128x128xbf16>, vector<4x128xf32> -> vector<4x128xf32>
    %10 = arith.addf %4, %9 : vector<4x128xf32>
    %c0_9 = arith.constant 0 : index
    %c0_10 = arith.constant 0 : index
    %c0_11 = arith.constant 0 : index
    %11 = vector.load %arg5[%c0_9, %c0_10, %c0_11] : memref<1x4x128xf32, #tpu.memory_space<vmem>>, vector<1x4x128xf32>
    %12 = vector.shape_cast %11 : vector<1x4x128xf32> to vector<4x128xf32>
    %13 = vector.shape_cast %10 : vector<4x128xf32> to vector<1x4x128xf32>
    tpu.vector_store %arg5[%c0_9, %c0_10, %c0_11], %13 {strides = array<i32>} : memref<1x4x128xf32, #tpu.memory_space<vmem>>, vector<1x4x128xf32>,
    %c0_i32_12 = arith.constant 0 : i32
    %14 = arith.cmpi eq, %arg2, %c0_i32_12 : i32
    %15 = arith.extui %14 : i1 to i32
    %c0_i32_13 = arith.constant 0 : i32
    %16 = arith.cmpi ne, %15, %c0_i32_13 : i32
    scf.if %16 {
      %c0_14 = arith.constant 0 : index
      %c0_15 = arith.constant 0 : index
      %c0_16 = arith.constant 0 : index
      %17 = vector.load %arg5[%c0_14, %c0_15, %c0_16] : memref<1x4x128xf32, #tpu.memory_space<vmem>>, vector<1x4x128xf32>
      %18 = vector.shape_cast %17 : vector<1x4x128xf32> to vector<4x128xf32>
      %cst_17 = arith.constant 1.250000e-01 : f32
      %19 = vector.broadcast %cst_17 : f32 to vector<4x128xf32>
      %20 = arith.mulf %18, %19 : vector<4x128xf32>
      %c0_18 = arith.constant 0 : index
      %c0_19 = arith.constant 0 : index
      %c0_20 = arith.constant 0 : index
      %21 = vector.load %arg5[%c0_18, %c0_19, %c0_20] : memref<1x4x128xf32, #tpu.memory_space<vmem>>, vector<1x4x128xf32>
      %22 = vector.shape_cast %21 : vector<1x4x128xf32> to vector<4x128xf32>
      %23 = vector.shape_cast %20 : vector<4x128xf32> to vector<1x4x128xf32>
      tpu.vector_store %arg5[%c0_18, %c0_19, %c0_20], %23 {strides = array<i32>} : memref<1x4x128xf32, #tpu.memory_space<vmem>>, vector<1x4x128xf32>,
    } else {
    }
    return
  }
  func.func @transform_0(%arg0: i32, %arg1: i32, %arg2: i32) -> (i32, i32, i32) {
    %c0_i32 = arith.constant 0 : i32
    %c0_i32_0 = arith.constant 0 : i32
    return %arg0, %c0_i32, %arg2 : i32, i32, i32
  }
  func.func @transform_1(%arg0: i32, %arg1: i32, %arg2: i32) -> (i32, i32, i32) {
    %c0_i32 = arith.constant 0 : i32
    return %arg0, %arg2, %arg1 : i32, i32, i32
  }
  func.func @transform_2(%arg0: i32, %arg1: i32, %arg2: i32) -> (i32, i32, i32) {
    %c0_i32 = arith.constant 0 : i32
    %c0_i32_0 = arith.constant 0 : i32
    return %arg0, %c0_i32, %arg1 : i32, i32, i32
  }
}

</mosaic_0001>

<llo_original>
// kernel: spectral_conv2d_dse_forward.3
$region0: #{spectral_conv2d_dse_forward.3}
  #allocation0 [shape = 'u32[]', space=smem, size = 0x4, offset = 0x4, fixed_abs, tag = 'smem constant byte address 0x4 - core index']
  #allocation1 [shape = 'u32[144,128]{1,0:T(1,128)}', space=vmem, size = 0x12000, scoped, tag = 'internal scratch']
  %s0 = inlined_call_operand.vmem [shape: bf16[2,4,128], index: 0, kind: input, shape index: {}]
  %s1 = inlined_call_operand.hbm [shape: bf16[2,128,128], index: 1, kind: input, shape index: {}]
  %s2 = inlined_call_operand.vmem [shape: f32[2,4,128], index: 2, kind: output, shape index: {}]
  %s3 = sld [smem:[#allocation0]]
  $region49: #{spectral_conv2d_dse_forward.3} parent=0
    _
  %s5 = ssub.s32 1, %s3
  %s6 = scalar_select 0, %s5, %s3
  $region1: #{spectral_conv2d_dse_forward.3} parent=0
    #allocation2 [shape = 'u8[65536]{0}', space=vmem, size = 0x10000, scoped, tag = 'input window, operand 1']
    #allocation3 [shape = 's32[2]{0}', space=sflag, size = 0x8, scoped, tag = 'scoped memory for spectral_conv2d_dse_forward.3']
    %7 = vsyncpa [#allocation3], 0
    %s8 = scalar_lea.sflag [#allocation3], 1
    %9 = vsyncpa %s8, 0
    loop: start=0, step=1, limit=4
    $region2: #{spectral_conv2d_dse_forward.3} parent=1 // loop_pre_header
      _
    $region3: #{spectral_conv2d_dse_forward.3} parent=1 // loop_header
      %s11 = sphi 0, %s15
      %p12 = scmp.ge.s32.totalorder %s11, 4
      %s18 = sphi 0, %s37
      %s19 = sphi 0, %s33
      %s20 = sphi 0, %s29
      %s21 = sphi 0, %s18
      %s22 = sphi 0, %s19
      %s23 = sphi 0, %s20
      %s24 = sphi 0, %s21
      %s25 = sphi 0, %s22
      %s26 = sphi 0, %s23
      %s42 = sphi 0, %s44
      %s45 = sphi 0, %s42
      %s46 = sphi 0, %s45
      %s62 = sphi 0, %s46
      %s72 = sphi 0, %s74
      %s75 = sphi 0, %s72
      %s76 = sphi 0, %s75
      %s92 = sphi 0, %s76
      %s100 = sphi 0, %s102
      %s103 = sphi 0, %s100
      %s104 = sphi 0, %s103
      %s120 = sphi 0, %s104
    $region4: #{spectral_conv2d_dse_forward.3} parent=1 // loop_header_branch
      %14 = sbr.rel (%p12) target = $region8
    $region5: #{spectral_conv2d_dse_forward.3} parent=1 // loop_body
      %s16 = ssub.s32 %s11, 1
      %s17 = ssub.s32 %s11, 2
      %s27 = sadd.s32 1, %s20
      %p28 = scmp.ge.s32.totalorder %s27, 1
      %s29 = scalar_select %p28, 0, %s27
      %s30 = sadd.s32 1, %s19
      %s31 = scalar_select %p28, %s30, %s19
      %p32 = scmp.ge.s32.totalorder %s31, 1
      %s33 = scalar_select %p32, 0, %s31
      %s34 = sadd.s32 1, %s18
      %s35 = scalar_select %p32, %s34, %s18
      %p36 = scmp.ge.s32.totalorder %s35, 2
      %s37 = scalar_select %p36, 0, %s35
      %s38 = ssub.s32 %s18, %s37
      %s39 = ssub.s32 %s20, %s29
      %s40 = sor.u32 %s38, %s39
      %p41 = scmp.eq.s32.totalorder %s40, 0
      %s43 = sadd.s32 %s42, 1
      %s44 = scalar_select %p41, %s42, %s43
      %p47 = pneg %p41
      %p48 = scmp.eq.s32.totalorder %s11, 1
      %p49 = por %p47, %p48
      %p50 = scmp.ne.s32.totalorder %s42, %s45
      %p51 = scmp.eq.s32.totalorder %s11, 0
      %p52 = por %p50, %p51
      %p53 = scmp.ne.s32.totalorder %s42, %s45
      %p54 = scmp.eq.s32.totalorder %s16, 1
      %p55 = por %p53, %p54
      %p56 = scmp.ne.s32.totalorder %s45, %s46
      %p57 = scmp.eq.s32.totalorder %s16, 0
      %p58 = por %p56, %p57
      %p59 = scmp.ne.s32.totalorder %s45, %s46
      %p60 = scmp.eq.s32.totalorder %s17, 1
      %p61 = por %p59, %p60
      %p63 = scmp.ne.s32.totalorder %s46, %s62
      %p64 = scmp.eq.s32.totalorder %s17, 0
      %p65 = por %p63, %p64
      %s66 = ssub.s32 %s18, %s37
      %s67 = ssub.s32 %s20, %s29
      %s68 = sor.u32 %s66, %s67
      %s69 = ssub.s32 %s19, %s33
      %s70 = sor.u32 %s68, %s69
      %p71 = scmp.eq.s32.totalorder %s70, 0
      %s73 = sadd.s32 %s72, 1
      %s74 = scalar_select %p71, %s72, %s73
      %p77 = pneg %p71
      %p78 = scmp.eq.s32.totalorder %s11, 1
      %p79 = por %p77, %p78
      %p80 = scmp.ne.s32.totalorder %s72, %s75
      %p81 = scmp.eq.s32.totalorder %s11, 0
      %p82 = por %p80, %p81
      %p83 = scmp.ne.s32.totalorder %s72, %s75
      %p84 = scmp.eq.s32.totalorder %s16, 1
      %p85 = por %p83, %p84
      %p86 = scmp.ne.s32.totalorder %s75, %s76
      %p87 = scmp.eq.s32.totalorder %s16, 0
      %p88 = por %p86, %p87
      %p89 = scmp.ne.s32.totalorder %s75, %s76
      %p90 = scmp.eq.s32.totalorder %s17, 1
      %p91 = por %p89, %p90
      %p93 = scmp.ne.s32.totalorder %s76, %s92
      %p94 = scmp.eq.s32.totalorder %s17, 0
      %p95 = por %p93, %p94
      %s96 = ssub.s32 %s18, %s37
      %s97 = ssub.s32 %s19, %s33
      %s98 = sor.u32 %s96, %s97
      %p99 = scmp.eq.s32.totalorder %s98, 0
      %s101 = sadd.s32 %s100, 1
      %s102 = scalar_select %p99, %s100, %s101
      %p105 = pneg %p99
      %p106 = scmp.eq.s32.totalorder %s11, 1
      %p107 = por %p105, %p106
      %p108 = scmp.ne.s32.totalorder %s100, %s103
      %p109 = scmp.eq.s32.totalorder %s11, 0
      %p110 = por %p108, %p109
      %p111 = scmp.ne.s32.totalorder %s100, %s103
      %p112 = scmp.eq.s32.totalorder %s16, 1
      %p113 = por %p111, %p112
      %p114 = scmp.ne.s32.totalorder %s103, %s104
      %p115 = scmp.eq.s32.totalorder %s16, 0
      %p116 = por %p114, %p115
      %p117 = scmp.ne.s32.totalorder %s103, %s104
      %p118 = scmp.eq.s32.totalorder %s17, 1
      %p119 = por %p117, %p118
      %p121 = scmp.ne.s32.totalorder %s104, %s120
      %p122 = scmp.eq.s32.totalorder %s17, 0
      %p123 = por %p121, %p122
      %p124 = scmp.le.s32.totalorder 1, %s11
      %p125 = scmp.lt.s32.totalorder %s11, 3
      %p126 = pnand %p124, %p125
      %p127 = pneg %p126
      // Predicated region
      $region9: #{spectral_conv2d_dse_forward.3} parent=5 // pred_check
        _
      $region10: #{spectral_conv2d_dse_forward.3} parent=5 // pred_check_branch
        %129 = sbr.rel (%p126) target = $region12
      $region11: #{spectral_conv2d_dse_forward.3} parent=5 // pred_region
        %s130 = ssub.s32 %s11, 1
      $region12: #{spectral_conv2d_dse_forward.3} parent=5 // pred_fallthru
        _
      %p131 = scmp.lt.s32.totalorder %s11, 2
      // Predicated region
      $region13: #{spectral_conv2d_dse_forward.3} parent=5 // pred_check
        %p132 = pneg %p131
      $region14: #{spectral_conv2d_dse_forward.3} parent=5 // pred_check_branch
        %134 = sbr.rel (%p132) target = $region16
      $region15: #{spectral_conv2d_dse_forward.3} parent=5 // pred_region
        // Predicated region
        $region17: #{spectral_conv2d_dse_forward.3} parent=15 // pred_check
          %p135 = pneg %p52
        $region18: #{spectral_conv2d_dse_forward.3} parent=15 // pred_check_branch
          %137 = sbr.rel (%p135) target = $region20
        $region19: #{spectral_conv2d_dse_forward.3} parent=15 // pred_region
          %p138 = scmp.lt.s32.totalorder %s18, 1
          %s139 = scalar_select %p138, %s18, 1
          %p140 = scmp.lt.s32.totalorder %s20, 0
          %s141 = scalar_select %p140, %s20, 0
          %s142 = sadd.s32 %s141, %s139
          %s143 = smul.addr %s142, 2
          %s144 = scalar_lea.vmem %s0, %s143
        $region20: #{spectral_conv2d_dse_forward.3} parent=15 // pred_fallthru
          _
        // Predicated region
        $region21: #{spectral_conv2d_dse_forward.3} parent=15 // pred_check
          %p145 = pneg %p82
        $region22: #{spectral_conv2d_dse_forward.3} parent=15 // pred_check_branch
          %147 = sbr.rel (%p145) target = $region24
        $region23: #{spectral_conv2d_dse_forward.3} parent=15 // pred_region
          %s148 = sand.u32 %s72, 1
          %s149 = scalar_lea.sflag [#allocation3], %s148
          %s150 = sand.u32 %s72, 1
          %s151 = smul.addr %s150, 64
          %s152 = scalar_lea.vmem [#allocation2], %s151
          %s153 = smul.u32 16, %s20
          %s155 = ssub.s32 1024, 1024
          %156 = vsyncadd %s149, %s155
          %s157 = sadd.s32 %s19, %s153
          %s158 = smul.addr %s18, 16
          %s159 = sadd.s32 %s157, %s158
          %s160 = smul.addr %s159, 64
          %s161 = scalar_lea.hbm %s1, %s160
          %s162 = sshll.u32 %s152, 4
          %s163 = int_to_ptr.vmem [resolvable:$true] %s162
          %168 = dma.hbm_to_vmem [thread:$0]  %s161, 1024, %s163, %s149, 64, 64, 4
        $region24: #{spectral_conv2d_dse_forward.3} parent=15 // pred_fallthru
          _
      $region16: #{spectral_conv2d_dse_forward.3} parent=5 // pred_fallthru
        _
      %p169 = scmp.le.s32.totalorder 1, %s11
      %p170 = scmp.lt.s32.totalorder %s11, 3
      %p171 = pnand %p169, %p170
      %p172 = pneg %p171
      // Predicated region
      $region25: #{spectral_conv2d_dse_forward.3} parent=5 // pred_check
        _
      $region26: #{spectral_conv2d_dse_forward.3} parent=5 // pred_check_branch
        %174 = sbr.rel (%p171) target = $region28
      $region27: #{spectral_conv2d_dse_forward.3} parent=5 // pred_region
        %s175 = ssub.s32 %s11, 1
        %s176 = sand.u32 %s75, 1
        %s177 = scalar_lea.sflag [#allocation3], %s176
        %s178 = sand.u32 %s75, 1
        %s179 = smul.addr %s178, 64
        %s180 = scalar_lea.vmem [#allocation2], %s179
        // Predicated region
        $region29: #{spectral_conv2d_dse_forward.3} parent=27 // pred_check
          %p181 = pneg %p88
        $region30: #{spectral_conv2d_dse_forward.3} parent=27 // pred_check_branch
          %183 = sbr.rel (%p181) target = $region32
        $region31: #{spectral_conv2d_dse_forward.3} parent=27 // pred_region
          %184 = dma.done %s177, 1024
        $region32: #{spectral_conv2d_dse_forward.3} parent=27 // pred_fallthru
          _
        %p185 = scmp.lt.s32.totalorder %s21, 1
        %s186 = scalar_select %p185, %s21, 1
        %p187 = scmp.lt.s32.totalorder %s23, 0
        %s188 = scalar_select %p187, %s23, 0
        %s189 = sadd.s32 %s188, %s186
        %s190 = smul.addr %s189, 2
        %s191 = scalar_lea.vmem %s0, %s190
        %p192 = pneg %p58
        %p193 = pneg %p55
        %s194 = sand.u32 %s75, 1
        %s195 = scalar_lea.sflag [#allocation3], %s194
        %s196 = sand.u32 %s75, 1
        %s197 = smul.addr %s196, 64
        %s198 = scalar_lea.vmem [#allocation2], %s197
        %p199 = pneg %p88
        %p200 = pneg %p85
        %p201 = pneg %p116
        %p202 = pneg %p113
        %p203 = scmp.lt.s32.totalorder %s21, 1
        %s204 = scalar_select %p203, %s21, 1
        %p205 = scmp.lt.s32.totalorder %s22, 0
        %s206 = scalar_select %p205, %s22, 0
        %s207 = sadd.s32 %s206, %s204
        %s208 = smul.addr %s207, 4
        %s209 = scalar_lea.vmem %s2, %s208
        %p210 = scmp.lt.s32.totalorder %s21, 1
        %s211 = scalar_select %p210, %s21, 1
        %p212 = scmp.lt.s32.totalorder %s23, 0
        %s213 = scalar_select %p212, %s23, 0
        %s214 = sadd.s32 %s213, %s211
        %s215 = smul.addr %s214, 2
        %s216 = scalar_lea.vmem %s0, %s215
        %s217 = smul.u32 16, %s23
        %p218 = scmp.lt.s32.totalorder %s21, 1
        %s219 = scalar_select %p218, %s21, 1
        %p220 = scmp.lt.s32.totalorder %s22, 0
        %s221 = scalar_select %p220, %s22, 0
        %s222 = sadd.s32 %s221, %s219
        %s223 = smul.addr %s222, 4
        %s224 = scalar_lea.vmem %s2, %s223
        %p226 = scmp.eq.s32.totalorder %s23, 0
        // Predicated region
        $region33: #{spectral_conv2d_dse_forward.3} parent=27 // pred_check
          %p227 = pneg %p226
        $region34: #{spectral_conv2d_dse_forward.3} parent=27 // pred_check_branch
          %229 = sbr.rel (%p227) target = $region36
        $region35: #{spectral_conv2d_dse_forward.3} parent=27 // pred_region
          %230 = vst [vmem:[%s224] sm:$0xf] 0.0
        $region36: #{spectral_conv2d_dse_forward.3} parent=27 // pred_fallthru
          _
        %v231 = vld [vmem:[%s224] sm:$0xf]
        %v232 = vld [vmem:[%s216] sm:$0x3]
        %v233 = vld [vmem:[%s180] sm:$0xf]
        %v234 = vld [vmem:[%s180 + $0x4] sm:$0xf]
        %v235 = vld [vmem:[%s180 + $0x8] sm:$0xf]
        %v236 = vld [vmem:[%s180 + $0xc] sm:$0xf]
        %v237 = vld [vmem:[%s180 + $0x10] sm:$0xf]
        %v238 = vld [vmem:[%s180 + $0x14] sm:$0xf]
        %v239 = vld [vmem:[%s180 + $0x18] sm:$0xf]
        %v240 = vld [vmem:[%s180 + $0x1c] sm:$0xf]
        %v241 = vld [vmem:[%s180 + $0x20] sm:$0xf]
        %v242 = vld [vmem:[%s180 + $0x24] sm:$0xf]
        %v243 = vld [vmem:[%s180 + $0x28] sm:$0xf]
        %v244 = vld [vmem:[%s180 + $0x2c] sm:$0xf]
        %v245 = vld [vmem:[%s180 + $0x30] sm:$0xf]
        %v246 = vld [vmem:[%s180 + $0x34] sm:$0xf]
        %v247 = vld [vmem:[%s180 + $0x38] sm:$0xf]
        %v248 = vld [vmem:[%s180 + $0x3c] sm:$0xf]
        %v265 = vunpack.c.l.b16 %v233
        %v266 = vunpack.c.l.b16 %v234
        %v267 = vunpack.c.l.b16 %v235
        %v268 = vunpack.c.l.b16 %v236
        %v269 = vunpack.c.l.b16 %v237
        %v270 = vunpack.c.l.b16 %v238
        %v271 = vunpack.c.l.b16 %v239
        %v272 = vunpack.c.l.b16 %v240
        %v273 = vunpack.c.l.b16 %v241
        %v274 = vunpack.c.l.b16 %v242
        %v275 = vunpack.c.l.b16 %v243
        %v276 = vunpack.c.l.b16 %v244
        %v277 = vunpack.c.l.b16 %v245
        %v278 = vunpack.c.l.b16 %v246
        %v279 = vunpack.c.l.b16 %v247
        %v280 = vunpack.c.l.b16 %v248
        %v281 = vpack.c.b16 %v266, %v265
        %v282 = vpack.c.b16 %v268, %v267
        %v283 = vpack.c.b16 %v270, %v269
        %v284 = vpack.c.b16 %v272, %v271
        %v285 = vpack.c.b16 %v274, %v273
        %v286 = vpack.c.b16 %v276, %v275
        %v287 = vpack.c.b16 %v278, %v277
        %v288 = vpack.c.b16 %v280, %v279
        %297 = vmatprep.subr.bf16.mxu0 0
        %298 = vmatpush1.bf16.msra.mxu0 %v281
        %299 = vmatprep.subr.bf16.mxu0 0
        %300 = vmatpush1.bf16.msra.mxu0 %v282
        %301 = vmatprep.subr.bf16.mxu0 0
        %302 = vmatpush1.bf16.msra.mxu0 %v283
        %303 = vmatprep.subr.bf16.mxu0 0
        %304 = vmatpush1.bf16.msra.mxu0 %v284
        %305 = vmatprep.subr.bf16.mxu0 0
        %306 = vmatpush1.bf16.msra.mxu0 %v285
        %307 = vmatprep.subr.bf16.mxu0 0
        %308 = vmatpush1.bf16.msra.mxu0 %v286
        %309 = vmatprep.subr.bf16.mxu0 0
        %310 = vmatpush1.bf16.msra.mxu0 %v287
        %311 = vmatprep.subr.bf16.mxu0 0
        %312 = vmatpush1.bf16.msra.mxu0 %v288
        %313 = vmatprep.subr.bf16.mxu0 0
        %314 = vmatpush1.bf16.msra.mxu0 0
        %315 = vmatprep.subr.bf16.mxu0 0
        %316 = vmatpush1.bf16.msra.mxu0 0
        %317 = vmatprep.subr.bf16.mxu0 0
        %318 = vmatpush1.bf16.msra.mxu0 0
        %319 = vmatprep.subr.bf16.mxu0 0
        %320 = vmatpush1.bf16.msra.mxu0 0
        %321 = vmatprep.subr.bf16.mxu0 0
        %322 = vmatpush1.bf16.msra.mxu0 0
        %323 = vmatprep.subr.bf16.mxu0 0
        %324 = vmatpush1.bf16.msra.mxu0 0
        %325 = vmatprep.subr.bf16.mxu0 0
        %326 = vmatpush1.bf16.msra.mxu0 0
        %327 = vmatprep.subr.bf16.mxu0 0
        %328 = vmatpush1.bf16.msra.mxu0 0
        %329 = vmatprep.mubr.bf16.mxu0 0
        %330 = vmatmul.mubr.bf16.gmra.mrb[0].mxu0 %v232
        %v331 = vpop.f32.mrb[0].mxu0
        %v332 = vadd.f32 0.0, %v331
        %v333 = vpop.f32.mrb[0].mxu0
        %v334 = vpop.f32.mrb[0].mxu0
        %v335 = vpop.f32.mrb[0].mxu0
        %336 = vdwg.mxu0
        %v337 = vadd.f32 %v231, %v332
        %338 = vst [vmem:[%s224] sm:$0xf] %v337
        %p339 = scmp.lt.s32.totalorder %s21, 1
        %s340 = scalar_select %p339, %s21, 1
        %p341 = scmp.lt.s32.totalorder %s22, 0
        %s342 = scalar_select %p341, %s22, 0
        %s343 = sadd.s32 %s342, %s340
        %s344 = smul.addr %s343, 4
        %s345 = scalar_lea.vmem %s2, %s344
        // Predicated region
        $region37: #{spectral_conv2d_dse_forward.3} parent=27 // pred_check
          %p346 = pneg %p113
        $region38: #{spectral_conv2d_dse_forward.3} parent=27 // pred_check_branch
          %348 = sbr.rel (%p346) target = $region40
        $region39: #{spectral_conv2d_dse_forward.3} parent=27 // pred_region
          _
        $region40: #{spectral_conv2d_dse_forward.3} parent=27 // pred_fallthru
          _
      $region28: #{spectral_conv2d_dse_forward.3} parent=5 // pred_fallthru
        _
      %p349 = scmp.le.s32.totalorder 2, %s11
      // Predicated region
      $region41: #{spectral_conv2d_dse_forward.3} parent=5 // pred_check
        %p350 = pneg %p349
      $region42: #{spectral_conv2d_dse_forward.3} parent=5 // pred_check_branch
        %352 = sbr.rel (%p350) target = $region44
      $region43: #{spectral_conv2d_dse_forward.3} parent=5 // pred_region
        %s353 = ssub.s32 %s11, 2
        // Predicated region
        $region45: #{spectral_conv2d_dse_forward.3} parent=43 // pred_check
          %p354 = pneg %p119
        $region46: #{spectral_conv2d_dse_forward.3} parent=43 // pred_check_branch
          %356 = sbr.rel (%p354) target = $region48
        $region47: #{spectral_conv2d_dse_forward.3} parent=43 // pred_region
          %p357 = scmp.lt.s32.totalorder %s24, 1
          %s358 = scalar_select %p357, %s24, 1
          %p359 = scmp.lt.s32.totalorder %s25, 0
          %s360 = scalar_select %p359, %s25, 0
          %s361 = sadd.s32 %s360, %s358
          %s362 = smul.addr %s361, 4
          %s363 = scalar_lea.vmem %s2, %s362
        $region48: #{spectral_conv2d_dse_forward.3} parent=43 // pred_fallthru
          _
      $region44: #{spectral_conv2d_dse_forward.3} parent=5 // pred_fallthru
        _
    $region6: #{spectral_conv2d_dse_forward.3} parent=1 // loop_footer
      %s15 = sadd.s32 1, %s11
    $region7: #{spectral_conv2d_dse_forward.3} parent=1 // loop_footer_branch
      %10 = sbr.rel target = $region3
    $region8: #{spectral_conv2d_dse_forward.3} parent=1 // loop_exit
      _
    %364 = vsyncpa [#allocation3], 1
    %s365 = scalar_lea.sflag [#allocation3], 1
    %366 = vsyncpa %s365, 1

// kernel: spectral_conv2d_dse_forward.5
$region0: #{spectral_conv2d_dse_forward.5}
  #allocation0 [shape = 'u32[]', space=smem, size = 0x4, offset = 0x4, fixed_abs, tag = 'smem constant byte address 0x4 - core index']
  #allocation1 [shape = 'u32[144,128]{1,0:T(1,128)}', space=vmem, size = 0x12000, scoped, tag = 'internal scratch']
  %s0 = inlined_call_operand.vmem [shape: bf16[2,4,128], index: 0, kind: input, shape index: {}]
  %s1 = inlined_call_operand.vmem [shape: bf16[2,128,128], index: 1, kind: input, shape index: {}]
  %s2 = inlined_call_operand.hbm [shape: f32[2,4,128], index: 2, kind: output, shape index: {}]
  %s3 = sld [smem:[#allocation0]]
  $region49: #{spectral_conv2d_dse_forward.5} parent=0
    _
  %s5 = ssub.s32 1, %s3
  %s6 = scalar_select 0, %s5, %s3
  $region1: #{spectral_conv2d_dse_forward.5} parent=0
    #allocation2 [shape = 'u8[4096]{0}', space=vmem, size = 0x1000, scoped, tag = 'output window, operand 0']
    #allocation3 [shape = 's32[2]{0}', space=sflag, size = 0x8, scoped, tag = 'scoped memory for spectral_conv2d_dse_forward.5']
    %7 = vsyncpa [#allocation3], 0
    %s8 = scalar_lea.sflag [#allocation3], 1
    %9 = vsyncpa %s8, 0
    loop: start=0, step=1, limit=4
    $region2: #{spectral_conv2d_dse_forward.5} parent=1 // loop_pre_header
      _
    $region3: #{spectral_conv2d_dse_forward.5} parent=1 // loop_header
      %s11 = sphi 0, %s15
      %p12 = scmp.ge.s32.totalorder %s11, 4
      %s18 = sphi 0, %s37
      %s19 = sphi 0, %s33
      %s20 = sphi 0, %s29
      %s21 = sphi 0, %s18
      %s22 = sphi 0, %s19
      %s23 = sphi 0, %s20
      %s24 = sphi 0, %s21
      %s25 = sphi 0, %s22
      %s26 = sphi 0, %s23
      %s42 = sphi 0, %s44
      %s45 = sphi 0, %s42
      %s46 = sphi 0, %s45
      %s62 = sphi 0, %s46
      %s72 = sphi 0, %s74
      %s75 = sphi 0, %s72
      %s76 = sphi 0, %s75
      %s92 = sphi 0, %s76
      %s100 = sphi 0, %s102
      %s103 = sphi 0, %s100
      %s104 = sphi 0, %s103
      %s120 = sphi 0, %s104
    $region4: #{spectral_conv2d_dse_forward.5} parent=1 // loop_header_branch
      %14 = sbr.rel (%p12) target = $region8
    $region5: #{spectral_conv2d_dse_forward.5} parent=1 // loop_body
      %s16 = ssub.s32 %s11, 1
      %s17 = ssub.s32 %s11, 2
      %s27 = sadd.s32 1, %s20
      %p28 = scmp.ge.s32.totalorder %s27, 1
      %s29 = scalar_select %p28, 0, %s27
      %s30 = sadd.s32 1, %s19
      %s31 = scalar_select %p28, %s30, %s19
      %p32 = scmp.ge.s32.totalorder %s31, 1
      %s33 = scalar_select %p32, 0, %s31
      %s34 = sadd.s32 1, %s18
      %s35 = scalar_select %p32, %s34, %s18
      %p36 = scmp.ge.s32.totalorder %s35, 2
      %s37 = scalar_select %p36, 0, %s35
      %s38 = ssub.s32 %s18, %s37
      %s39 = ssub.s32 %s20, %s29
      %s40 = sor.u32 %s38, %s39
      %p41 = scmp.eq.s32.totalorder %s40, 0
      %s43 = sadd.s32 %s42, 1
      %s44 = scalar_select %p41, %s42, %s43
      %p47 = pneg %p41
      %p48 = scmp.eq.s32.totalorder %s11, 1
      %p49 = por %p47, %p48
      %p50 = scmp.ne.s32.totalorder %s42, %s45
      %p51 = scmp.eq.s32.totalorder %s11, 0
      %p52 = por %p50, %p51
      %p53 = scmp.ne.s32.totalorder %s42, %s45
      %p54 = scmp.eq.s32.totalorder %s16, 1
      %p55 = por %p53, %p54
      %p56 = scmp.ne.s32.totalorder %s45, %s46
      %p57 = scmp.eq.s32.totalorder %s16, 0
      %p58 = por %p56, %p57
      %p59 = scmp.ne.s32.totalorder %s45, %s46
      %p60 = scmp.eq.s32.totalorder %s17, 1
      %p61 = por %p59, %p60
      %p63 = scmp.ne.s32.totalorder %s46, %s62
      %p64 = scmp.eq.s32.totalorder %s17, 0
      %p65 = por %p63, %p64
      %s66 = ssub.s32 %s18, %s37
      %s67 = ssub.s32 %s20, %s29
      %s68 = sor.u32 %s66, %s67
      %s69 = ssub.s32 %s19, %s33
      %s70 = sor.u32 %s68, %s69
      %p71 = scmp.eq.s32.totalorder %s70, 0
      %s73 = sadd.s32 %s72, 1
      %s74 = scalar_select %p71, %s72, %s73
      %p77 = pneg %p71
      %p78 = scmp.eq.s32.totalorder %s11, 1
      %p79 = por %p77, %p78
      %p80 = scmp.ne.s32.totalorder %s72, %s75
      %p81 = scmp.eq.s32.totalorder %s11, 0
      %p82 = por %p80, %p81
      %p83 = scmp.ne.s32.totalorder %s72, %s75
      %p84 = scmp.eq.s32.totalorder %s16, 1
      %p85 = por %p83, %p84
      %p86 = scmp.ne.s32.totalorder %s75, %s76
      %p87 = scmp.eq.s32.totalorder %s16, 0
      %p88 = por %p86, %p87
      %p89 = scmp.ne.s32.totalorder %s75, %s76
      %p90 = scmp.eq.s32.totalorder %s17, 1
      %p91 = por %p89, %p90
      %p93 = scmp.ne.s32.totalorder %s76, %s92
      %p94 = scmp.eq.s32.totalorder %s17, 0
      %p95 = por %p93, %p94
      %s96 = ssub.s32 %s18, %s37
      %s97 = ssub.s32 %s19, %s33
      %s98 = sor.u32 %s96, %s97
      %p99 = scmp.eq.s32.totalorder %s98, 0
      %s101 = sadd.s32 %s100, 1
      %s102 = scalar_select %p99, %s100, %s101
      %p105 = pneg %p99
      %p106 = scmp.eq.s32.totalorder %s11, 1
      %p107 = por %p105, %p106
      %p108 = scmp.ne.s32.totalorder %s100, %s103
      %p109 = scmp.eq.s32.totalorder %s11, 0
      %p110 = por %p108, %p109
      %p111 = scmp.ne.s32.totalorder %s100, %s103
      %p112 = scmp.eq.s32.totalorder %s16, 1
      %p113 = por %p111, %p112
      %p114 = scmp.ne.s32.totalorder %s103, %s104
      %p115 = scmp.eq.s32.totalorder %s16, 0
      %p116 = por %p114, %p115
      %p117 = scmp.ne.s32.totalorder %s103, %s104
      %p118 = scmp.eq.s32.totalorder %s17, 1
      %p119 = por %p117, %p118
      %p121 = scmp.ne.s32.totalorder %s104, %s120
      %p122 = scmp.eq.s32.totalorder %s17, 0
      %p123 = por %p121, %p122
      %p124 = scmp.le.s32.totalorder 1, %s11
      %p125 = scmp.lt.s32.totalorder %s11, 3
      %p126 = pnand %p124, %p125
      %p127 = pneg %p126
      // Predicated region
      $region9: #{spectral_conv2d_dse_forward.5} parent=5 // pred_check
        _
      $region10: #{spectral_conv2d_dse_forward.5} parent=5 // pred_check_branch
        %129 = sbr.rel (%p126) target = $region12
      $region11: #{spectral_conv2d_dse_forward.5} parent=5 // pred_region
        %s130 = ssub.s32 %s11, 1
      $region12: #{spectral_conv2d_dse_forward.5} parent=5 // pred_fallthru
        _
      %p131 = scmp.lt.s32.totalorder %s11, 2
      // Predicated region
      $region13: #{spectral_conv2d_dse_forward.5} parent=5 // pred_check
        %p132 = pneg %p131
      $region14: #{spectral_conv2d_dse_forward.5} parent=5 // pred_check_branch
        %134 = sbr.rel (%p132) target = $region16
      $region15: #{spectral_conv2d_dse_forward.5} parent=5 // pred_region
        // Predicated region
        $region17: #{spectral_conv2d_dse_forward.5} parent=15 // pred_check
          %p135 = pneg %p52
        $region18: #{spectral_conv2d_dse_forward.5} parent=15 // pred_check_branch
          %137 = sbr.rel (%p135) target = $region20
        $region19: #{spectral_conv2d_dse_forward.5} parent=15 // pred_region
          %p138 = scmp.lt.s32.totalorder %s18, 1
          %s139 = scalar_select %p138, %s18, 1
          %p140 = scmp.lt.s32.totalorder %s20, 0
          %s141 = scalar_select %p140, %s20, 0
          %s142 = sadd.s32 %s141, %s139
          %s143 = smul.addr %s142, 2
          %s144 = scalar_lea.vmem %s0, %s143
        $region20: #{spectral_conv2d_dse_forward.5} parent=15 // pred_fallthru
          _
        // Predicated region
        $region21: #{spectral_conv2d_dse_forward.5} parent=15 // pred_check
          %p145 = pneg %p82
        $region22: #{spectral_conv2d_dse_forward.5} parent=15 // pred_check_branch
          %147 = sbr.rel (%p145) target = $region24
        $region23: #{spectral_conv2d_dse_forward.5} parent=15 // pred_region
          %s148 = smul.u32 16, %s20
          %p149 = scmp.lt.s32.totalorder %s18, 1
          %s150 = scalar_select %p149, %s18, 1
          %p151 = scmp.lt.s32.totalorder %s148, 15
          %s152 = scalar_select %p151, %s148, 15
          %p153 = scmp.lt.s32.totalorder %s19, 0
          %s154 = scalar_select %p153, %s19, 0
          %s155 = sadd.s32 %s154, %s152
          %s156 = smul.addr %s150, 16
          %s157 = sadd.s32 %s155, %s156
          %s158 = smul.addr %s157, 4
          %s159 = scalar_lea.vmem %s1, %s158
          %s160 = smul.u32 16, %s20
        $region24: #{spectral_conv2d_dse_forward.5} parent=15 // pred_fallthru
          _
      $region16: #{spectral_conv2d_dse_forward.5} parent=5 // pred_fallthru
        _
      %p161 = scmp.le.s32.totalorder 1, %s11
      %p162 = scmp.lt.s32.totalorder %s11, 3
      %p163 = pnand %p161, %p162
      %p164 = pneg %p163
      // Predicated region
      $region25: #{spectral_conv2d_dse_forward.5} parent=5 // pred_check
        _
      $region26: #{spectral_conv2d_dse_forward.5} parent=5 // pred_check_branch
        %166 = sbr.rel (%p163) target = $region28
      $region27: #{spectral_conv2d_dse_forward.5} parent=5 // pred_region
        %s167 = ssub.s32 %s11, 1
        %p168 = scmp.lt.s32.totalorder %s21, 1
        %s169 = scalar_select %p168, %s21, 1
        %p170 = scmp.lt.s32.totalorder %s23, 0
        %s171 = scalar_select %p170, %s23, 0
        %s172 = sadd.s32 %s171, %s169
        %s173 = smul.addr %s172, 2
        %s174 = scalar_lea.vmem %s0, %s173
        %p175 = pneg %p58
        %p176 = pneg %p55
        %s177 = smul.u32 16, %s23
        %p178 = scmp.lt.s32.totalorder %s21, 1
        %s179 = scalar_select %p178, %s21, 1
        %p180 = scmp.lt.s32.totalorder %s177, 15
        %s181 = scalar_select %p180, %s177, 15
        %p182 = scmp.lt.s32.totalorder %s22, 0
        %s183 = scalar_select %p182, %s22, 0
        %s184 = sadd.s32 %s183, %s181
        %s185 = smul.addr %s179, 16
        %s186 = sadd.s32 %s184, %s185
        %s187 = smul.addr %s186, 4
        %s188 = scalar_lea.vmem %s1, %s187
        %p189 = pneg %p88
        %p190 = pneg %p85
        %p191 = pneg %p116
        %p192 = pneg %p113
        %s193 = sand.u32 %s103, 1
        %s194 = scalar_lea.sflag [#allocation3], %s193
        %s195 = sand.u32 %s103, 1
        %s196 = smul.addr %s195, 4
        %s197 = scalar_lea.vmem [#allocation2], %s196
        %p198 = scmp.lt.s32.totalorder %s21, 1
        %s199 = scalar_select %p198, %s21, 1
        %p200 = scmp.lt.s32.totalorder %s23, 0
        %s201 = scalar_select %p200, %s23, 0
        %s202 = sadd.s32 %s201, %s199
        %s203 = smul.addr %s202, 2
        %s204 = scalar_lea.vmem %s0, %s203
        %s205 = smul.u32 16, %s23
        %p206 = scmp.lt.s32.totalorder %s21, 1
        %s207 = scalar_select %p206, %s21, 1
        %p208 = scmp.lt.s32.totalorder %s205, 15
        %s209 = scalar_select %p208, %s205, 15
        %p210 = scmp.lt.s32.totalorder %s22, 0
        %s211 = scalar_select %p210, %s22, 0
        %s212 = sadd.s32 %s211, %s209
        %s213 = smul.addr %s207, 16
        %s214 = sadd.s32 %s212, %s213
        %s215 = smul.addr %s214, 4
        %s216 = scalar_lea.vmem %s1, %s215
        %s217 = smul.u32 16, %s23
        %p219 = scmp.eq.s32.totalorder %s23, 0
        // Predicated region
        $region29: #{spectral_conv2d_dse_forward.5} parent=27 // pred_check
          %p220 = pneg %p219
        $region30: #{spectral_conv2d_dse_forward.5} parent=27 // pred_check_branch
          %222 = sbr.rel (%p220) target = $region32
        $region31: #{spectral_conv2d_dse_forward.5} parent=27 // pred_region
          %223 = vst [vmem:[%s197] sm:$0xf] 0.0
        $region32: #{spectral_conv2d_dse_forward.5} parent=27 // pred_fallthru
          _
        %v224 = vld [vmem:[%s197] sm:$0xf]
        %v225 = vld [vmem:[%s204] sm:$0x3]
        %v226 = vld [vmem:[%s216] sm:$0xf]
        %v227 = vld [vmem:[%s216 + $0x4] sm:$0xf]
        %v228 = vld [vmem:[%s216 + $0x8] sm:$0xf]
        %v229 = vld [vmem:[%s216 + $0xc] sm:$0xf]
        %v230 = vld [vmem:[%s216 + $0x10] sm:$0xf]
        %v231 = vld [vmem:[%s216 + $0x14] sm:$0xf]
        %v232 = vld [vmem:[%s216 + $0x18] sm:$0xf]
        %v233 = vld [vmem:[%s216 + $0x1c] sm:$0xf]
        %v234 = vld [vmem:[%s216 + $0x20] sm:$0xf]
        %v235 = vld [vmem:[%s216 + $0x24] sm:$0xf]
        %v236 = vld [vmem:[%s216 + $0x28] sm:$0xf]
        %v237 = vld [vmem:[%s216 + $0x2c] sm:$0xf]
        %v238 = vld [vmem:[%s216 + $0x30] sm:$0xf]
        %v239 = vld [vmem:[%s216 + $0x34] sm:$0xf]
        %v240 = vld [vmem:[%s216 + $0x38] sm:$0xf]
        %v241 = vld [vmem:[%s216 + $0x3c] sm:$0xf]
        %v258 = vunpack.c.l.b16 %v226
        %v259 = vunpack.c.l.b16 %v227
        %v260 = vunpack.c.l.b16 %v228
        %v261 = vunpack.c.l.b16 %v229
        %v262 = vunpack.c.l.b16 %v230
        %v263 = vunpack.c.l.b16 %v231
        %v264 = vunpack.c.l.b16 %v232
        %v265 = vunpack.c.l.b16 %v233
        %v266 = vunpack.c.l.b16 %v234
        %v267 = vunpack.c.l.b16 %v235
        %v268 = vunpack.c.l.b16 %v236
        %v269 = vunpack.c.l.b16 %v237
        %v270 = vunpack.c.l.b16 %v238
        %v271 = vunpack.c.l.b16 %v239
        %v272 = vunpack.c.l.b16 %v240
        %v273 = vunpack.c.l.b16 %v241
        %v274 = vpack.c.b16 %v259, %v258
        %v275 = vpack.c.b16 %v261, %v260
        %v276 = vpack.c.b16 %v263, %v262
        %v277 = vpack.c.b16 %v265, %v264
        %v278 = vpack.c.b16 %v267, %v266
        %v279 = vpack.c.b16 %v269, %v268
        %v280 = vpack.c.b16 %v271, %v270
        %v281 = vpack.c.b16 %v273, %v272
        %290 = vmatprep.subr.bf16.mxu0 0
        %291 = vmatpush1.bf16.msra.mxu0 %v274
        %292 = vmatprep.subr.bf16.mxu0 0
        %293 = vmatpush1.bf16.msra.mxu0 %v275
        %294 = vmatprep.subr.bf16.mxu0 0
        %295 = vmatpush1.bf16.msra.mxu0 %v276
        %296 = vmatprep.subr.bf16.mxu0 0
        %297 = vmatpush1.bf16.msra.mxu0 %v277
        %298 = vmatprep.subr.bf16.mxu0 0
        %299 = vmatpush1.bf16.msra.mxu0 %v278
        %300 = vmatprep.subr.bf16.mxu0 0
        %301 = vmatpush1.bf16.msra.mxu0 %v279
        %302 = vmatprep.subr.bf16.mxu0 0
        %303 = vmatpush1.bf16.msra.mxu0 %v280
        %304 = vmatprep.subr.bf16.mxu0 0
        %305 = vmatpush1.bf16.msra.mxu0 %v281
        %306 = vmatprep.subr.bf16.mxu0 0
        %307 = vmatpush1.bf16.msra.mxu0 0
        %308 = vmatprep.subr.bf16.mxu0 0
        %309 = vmatpush1.bf16.msra.mxu0 0
        %310 = vmatprep.subr.bf16.mxu0 0
        %311 = vmatpush1.bf16.msra.mxu0 0
        %312 = vmatprep.subr.bf16.mxu0 0
        %313 = vmatpush1.bf16.msra.mxu0 0
        %314 = vmatprep.subr.bf16.mxu0 0
        %315 = vmatpush1.bf16.msra.mxu0 0
        %316 = vmatprep.subr.bf16.mxu0 0
        %317 = vmatpush1.bf16.msra.mxu0 0
        %318 = vmatprep.subr.bf16.mxu0 0
        %319 = vmatpush1.bf16.msra.mxu0 0
        %320 = vmatprep.subr.bf16.mxu0 0
        %321 = vmatpush1.bf16.msra.mxu0 0
        %322 = vmatprep.mubr.bf16.mxu0 0
        %323 = vmatmul.mubr.bf16.gmra.mrb[0].mxu0 %v225
        %v324 = vpop.f32.mrb[0].mxu0
        %v325 = vadd.f32 0.0, %v324
        %v326 = vpop.f32.mrb[0].mxu0
        %v327 = vpop.f32.mrb[0].mxu0
        %v328 = vpop.f32.mrb[0].mxu0
        %329 = vdwg.mxu0
        %v330 = vadd.f32 %v224, %v325
        %331 = vst [vmem:[%s197] sm:$0xf] %v330
        // Predicated region
        $region33: #{spectral_conv2d_dse_forward.5} parent=27 // pred_check
          %p332 = pneg %p219
        $region34: #{spectral_conv2d_dse_forward.5} parent=27 // pred_check_branch
          %334 = sbr.rel (%p332) target = $region36
        $region35: #{spectral_conv2d_dse_forward.5} parent=27 // pred_region
          %v335 = vld [vmem:[%s197] sm:$0xf]
          %v336 = vmul.f32 %v335, 0.125
          %337 = vst [vmem:[%s197] sm:$0xf] %v336
        $region36: #{spectral_conv2d_dse_forward.5} parent=27 // pred_fallthru
          _
        %s338 = sand.u32 %s103, 1
        %s339 = scalar_lea.sflag [#allocation3], %s338
        %s340 = sand.u32 %s103, 1
        %s341 = smul.addr %s340, 4
        %s342 = scalar_lea.vmem [#allocation2], %s341
        // Predicated region
        $region37: #{spectral_conv2d_dse_forward.5} parent=27 // pred_check
          %p343 = pneg %p113
        $region38: #{spectral_conv2d_dse_forward.5} parent=27 // pred_check_branch
          %345 = sbr.rel (%p343) target = $region40
        $region39: #{spectral_conv2d_dse_forward.5} parent=27 // pred_region
          %s347 = ssub.s32 64, 64
          %348 = vsyncadd %s339, %s347
          %s349 = sadd.s32 %s22, %s21
          %s350 = smul.addr %s349, 64
          %s351 = scalar_lea.hbm %s2, %s350
          %s353 = sshll.u32 %s342, 4
          %s354 = int_to_ptr.vmem [resolvable:$true] %s353
          %356 = dma.vmem_to_hbm [thread:$0]  %s354, 64, %s351, %s339
        $region40: #{spectral_conv2d_dse_forward.5} parent=27 // pred_fallthru
          _
      $region28: #{spectral_conv2d_dse_forward.5} parent=5 // pred_fallthru
        _
      %p357 = scmp.le.s32.totalorder 2, %s11
      // Predicated region
      $region41: #{spectral_conv2d_dse_forward.5} parent=5 // pred_check
        %p358 = pneg %p357
      $region42: #{spectral_conv2d_dse_forward.5} parent=5 // pred_check_branch
        %360 = sbr.rel (%p358) target = $region44
      $region43: #{spectral_conv2d_dse_forward.5} parent=5 // pred_region
        %s361 = ssub.s32 %s11, 2
        // Predicated region
        $region45: #{spectral_conv2d_dse_forward.5} parent=43 // pred_check
          %p362 = pneg %p119
        $region46: #{spectral_conv2d_dse_forward.5} parent=43 // pred_check_branch
          %364 = sbr.rel (%p362) target = $region48
        $region47: #{spectral_conv2d_dse_forward.5} parent=43 // pred_region
          %s365 = sand.u32 %s104, 1
          %s366 = scalar_lea.sflag [#allocation3], %s365
          %s367 = sand.u32 %s104, 1
          %s368 = smul.addr %s367, 4
          %s369 = scalar_lea.vmem [#allocation2], %s368
          %370 = dma.done %s366, 64
        $region48: #{spectral_conv2d_dse_forward.5} parent=43 // pred_fallthru
          _
      $region44: #{spectral_conv2d_dse_forward.5} parent=5 // pred_fallthru
        _
    $region6: #{spectral_conv2d_dse_forward.5} parent=1 // loop_footer
      %s15 = sadd.s32 1, %s11
    $region7: #{spectral_conv2d_dse_forward.5} parent=1 // loop_footer_branch
      %10 = sbr.rel target = $region3
    $region8: #{spectral_conv2d_dse_forward.5} parent=1 // loop_exit
      _
    %371 = vsyncpa [#allocation3], 1
    %s372 = scalar_lea.sflag [#allocation3], 1
    %373 = vsyncpa %s372, 1

// kernel: spectral_conv2d_dse_forward.4
$region0: #{spectral_conv2d_dse_forward.4}
  #allocation0 [shape = 'u32[]', space=smem, size = 0x4, offset = 0x4, fixed_abs, tag = 'smem constant byte address 0x4 - core index']
  #allocation1 [shape = 'u32[144,128]{1,0:T(1,128)}', space=vmem, size = 0x12000, scoped, tag = 'internal scratch']
  %s0 = inlined_call_operand.vmem [shape: bf16[2,4,128], index: 0, kind: input, shape index: {}]
  %s1 = inlined_call_operand.vmem [shape: bf16[2,4,128], index: 1, kind: input, shape index: {}]
  %s2 = inlined_call_operand.vmem [shape: bf16[4,4,128], index: 2, kind: input, shape index: {}]
  %s3 = inlined_call_operand.vmem [shape: bf16[4,4,128], index: 3, kind: input, shape index: {}]
  %s4 = inlined_call_operand.vmem [shape: f32[2,4,128], index: 4, kind: output, shape index: {0}]
  %s5 = inlined_call_operand.vmem [shape: f32[2,4,128], index: 5, kind: output, shape index: {1}]
  %6 = xla_tuple %s4, %s5
  %s7 = sld [smem:[#allocation0]]
  $region57: #{spectral_conv2d_dse_forward.4} parent=0
    _
  %s9 = ssub.s32 1, %s7
  %s10 = scalar_select 0, %s9, %s7
  loop: start=0, step=1, limit=4
  $region2: #{spectral_conv2d_dse_forward.4} parent=0 // loop_pre_header
    _
  $region3: #{spectral_conv2d_dse_forward.4} parent=0 // loop_header
    %s12 = sphi 0, %s16
    %p13 = scmp.ge.s32.totalorder %s12, 4
    %s19 = sphi 0, %s38
    %s20 = sphi 0, %s34
    %s21 = sphi 0, %s30
    %s22 = sphi 0, %s19
    %s23 = sphi 0, %s20
    %s24 = sphi 0, %s21
    %s25 = sphi 0, %s22
    %s26 = sphi 0, %s23
    %s27 = sphi 0, %s24
    %s43 = sphi 0, %s45
    %s46 = sphi 0, %s43
    %s47 = sphi 0, %s46
    %s63 = sphi 0, %s47
    %s71 = sphi 0, %s73
    %s74 = sphi 0, %s71
    %s75 = sphi 0, %s74
    %s91 = sphi 0, %s75
    %s99 = sphi 0, %s101
    %s102 = sphi 0, %s99
    %s103 = sphi 0, %s102
    %s119 = sphi 0, %s103
    %s127 = sphi 0, %s129
    %s130 = sphi 0, %s127
    %s131 = sphi 0, %s130
    %s147 = sphi 0, %s131
    %s157 = sphi 0, %s159
    %s160 = sphi 0, %s157
    %s161 = sphi 0, %s160
    %s177 = sphi 0, %s161
    %s187 = sphi 0, %s189
    %s190 = sphi 0, %s187
    %s191 = sphi 0, %s190
    %s207 = sphi 0, %s191
  $region4: #{spectral_conv2d_dse_forward.4} parent=0 // loop_header_branch
    %15 = sbr.rel (%p13) target = $region8
  $region5: #{spectral_conv2d_dse_forward.4} parent=0 // loop_body
    %s17 = ssub.s32 %s12, 1
    %s18 = ssub.s32 %s12, 2
    %s28 = sadd.s32 1, %s21
    %p29 = scmp.ge.s32.totalorder %s28, 1
    %s30 = scalar_select %p29, 0, %s28
    %s31 = sadd.s32 1, %s20
    %s32 = scalar_select %p29, %s31, %s20
    %p33 = scmp.ge.s32.totalorder %s32, 1
    %s34 = scalar_select %p33, 0, %s32
    %s35 = sadd.s32 1, %s19
    %s36 = scalar_select %p33, %s35, %s19
    %p37 = scmp.ge.s32.totalorder %s36, 2
    %s38 = scalar_select %p37, 0, %s36
    %s39 = ssub.s32 %s19, %s38
    %s40 = ssub.s32 %s21, %s30
    %s41 = sor.u32 %s39, %s40
    %p42 = scmp.eq.s32.totalorder %s41, 0
    %s44 = sadd.s32 %s43, 1
    %s45 = scalar_select %p42, %s43, %s44
    %p48 = pneg %p42
    %p49 = scmp.eq.s32.totalorder %s12, 1
    %p50 = por %p48, %p49
    %p51 = scmp.ne.s32.totalorder %s43, %s46
    %p52 = scmp.eq.s32.totalorder %s12, 0
    %p53 = por %p51, %p52
    %p54 = scmp.ne.s32.totalorder %s43, %s46
    %p55 = scmp.eq.s32.totalorder %s17, 1
    %p56 = por %p54, %p55
    %p57 = scmp.ne.s32.totalorder %s46, %s47
    %p58 = scmp.eq.s32.totalorder %s17, 0
    %p59 = por %p57, %p58
    %p60 = scmp.ne.s32.totalorder %s46, %s47
    %p61 = scmp.eq.s32.totalorder %s18, 1
    %p62 = por %p60, %p61
    %p64 = scmp.ne.s32.totalorder %s47, %s63
    %p65 = scmp.eq.s32.totalorder %s18, 0
    %p66 = por %p64, %p65
    %s67 = ssub.s32 %s19, %s38
    %s68 = ssub.s32 %s21, %s30
    %s69 = sor.u32 %s67, %s68
    %p70 = scmp.eq.s32.totalorder %s69, 0
    %s72 = sadd.s32 %s71, 1
    %s73 = scalar_select %p70, %s71, %s72
    %p76 = pneg %p70
    %p77 = scmp.eq.s32.totalorder %s12, 1
    %p78 = por %p76, %p77
    %p79 = scmp.ne.s32.totalorder %s71, %s74
    %p80 = scmp.eq.s32.totalorder %s12, 0
    %p81 = por %p79, %p80
    %p82 = scmp.ne.s32.totalorder %s71, %s74
    %p83 = scmp.eq.s32.totalorder %s17, 1
    %p84 = por %p82, %p83
    %p85 = scmp.ne.s32.totalorder %s74, %s75
    %p86 = scmp.eq.s32.totalorder %s17, 0
    %p87 = por %p85, %p86
    %p88 = scmp.ne.s32.totalorder %s74, %s75
    %p89 = scmp.eq.s32.totalorder %s18, 1
    %p90 = por %p88, %p89
    %p92 = scmp.ne.s32.totalorder %s75, %s91
    %p93 = scmp.eq.s32.totalorder %s18, 0
    %p94 = por %p92, %p93
    %s95 = ssub.s32 %s20, %s34
    %s96 = ssub.s32 %s21, %s30
    %s97 = sor.u32 %s95, %s96
    %p98 = scmp.eq.s32.totalorder %s97, 0
    %s100 = sadd.s32 %s99, 1
    %s101 = scalar_select %p98, %s99, %s100
    %p104 = pneg %p98
    %p105 = scmp.eq.s32.totalorder %s12, 1
    %p106 = por %p104, %p105
    %p107 = scmp.ne.s32.totalorder %s99, %s102
    %p108 = scmp.eq.s32.totalorder %s12, 0
    %p109 = por %p107, %p108
    %p110 = scmp.ne.s32.totalorder %s99, %s102
    %p111 = scmp.eq.s32.totalorder %s17, 1
    %p112 = por %p110, %p111
    %p113 = scmp.ne.s32.totalorder %s102, %s103
    %p114 = scmp.eq.s32.totalorder %s17, 0
    %p115 = por %p113, %p114
    %p116 = scmp.ne.s32.totalorder %s102, %s103
    %p117 = scmp.eq.s32.totalorder %s18, 1
    %p118 = por %p116, %p117
    %p120 = scmp.ne.s32.totalorder %s103, %s119
    %p121 = scmp.eq.s32.totalorder %s18, 0
    %p122 = por %p120, %p121
    %s123 = ssub.s32 %s20, %s34
    %s124 = ssub.s32 %s21, %s30
    %s125 = sor.u32 %s123, %s124
    %p126 = scmp.eq.s32.totalorder %s125, 0
    %s128 = sadd.s32 %s127, 1
    %s129 = scalar_select %p126, %s127, %s128
    %p132 = pneg %p126
    %p133 = scmp.eq.s32.totalorder %s12, 1
    %p134 = por %p132, %p133
    %p135 = scmp.ne.s32.totalorder %s127, %s130
    %p136 = scmp.eq.s32.totalorder %s12, 0
    %p137 = por %p135, %p136
    %p138 = scmp.ne.s32.totalorder %s127, %s130
    %p139 = scmp.eq.s32.totalorder %s17, 1
    %p140 = por %p138, %p139
    %p141 = scmp.ne.s32.totalorder %s130, %s131
    %p142 = scmp.eq.s32.totalorder %s17, 0
    %p143 = por %p141, %p142
    %p144 = scmp.ne.s32.totalorder %s130, %s131
    %p145 = scmp.eq.s32.totalorder %s18, 1
    %p146 = por %p144, %p145
    %p148 = scmp.ne.s32.totalorder %s131, %s147
    %p149 = scmp.eq.s32.totalorder %s18, 0
    %p150 = por %p148, %p149
    %s151 = ssub.s32 %s19, %s38
    %s152 = ssub.s32 %s20, %s34
    %s153 = sor.u32 %s151, %s152
    %s154 = ssub.s32 %s21, %s30
    %s155 = sor.u32 %s153, %s154
    %p156 = scmp.eq.s32.totalorder %s155, 0
    %s158 = sadd.s32 %s157, 1
    %s159 = scalar_select %p156, %s157, %s158
    %p162 = pneg %p156
    %p163 = scmp.eq.s32.totalorder %s12, 1
    %p164 = por %p162, %p163
    %p165 = scmp.ne.s32.totalorder %s157, %s160
    %p166 = scmp.eq.s32.totalorder %s12, 0
    %p167 = por %p165, %p166
    %p168 = scmp.ne.s32.totalorder %s157, %s160
    %p169 = scmp.eq.s32.totalorder %s17, 1
    %p170 = por %p168, %p169
    %p171 = scmp.ne.s32.totalorder %s160, %s161
    %p172 = scmp.eq.s32.totalorder %s17, 0
    %p173 = por %p171, %p172
    %p174 = scmp.ne.s32.totalorder %s160, %s161
    %p175 = scmp.eq.s32.totalorder %s18, 1
    %p176 = por %p174, %p175
    %p178 = scmp.ne.s32.totalorder %s161, %s177
    %p179 = scmp.eq.s32.totalorder %s18, 0
    %p180 = por %p178, %p179
    %s181 = ssub.s32 %s19, %s38
    %s182 = ssub.s32 %s20, %s34
    %s183 = sor.u32 %s181, %s182
    %s184 = ssub.s32 %s21, %s30
    %s185 = sor.u32 %s183, %s184
    %p186 = scmp.eq.s32.totalorder %s185, 0
    %s188 = sadd.s32 %s187, 1
    %s189 = scalar_select %p186, %s187, %s188
    %p192 = pneg %p186
    %p193 = scmp.eq.s32.totalorder %s12, 1
    %p194 = por %p192, %p193
    %p195 = scmp.ne.s32.totalorder %s187, %s190
    %p196 = scmp.eq.s32.totalorder %s12, 0
    %p197 = por %p195, %p196
    %p198 = scmp.ne.s32.totalorder %s187, %s190
    %p199 = scmp.eq.s32.totalorder %s17, 1
    %p200 = por %p198, %p199
    %p201 = scmp.ne.s32.totalorder %s190, %s191
    %p202 = scmp.eq.s32.totalorder %s17, 0
    %p203 = por %p201, %p202
    %p204 = scmp.ne.s32.totalorder %s190, %s191
    %p205 = scmp.eq.s32.totalorder %s18, 1
    %p206 = por %p204, %p205
    %p208 = scmp.ne.s32.totalorder %s191, %s207
    %p209 = scmp.eq.s32.totalorder %s18, 0
    %p210 = por %p208, %p209
    %p211 = scmp.le.s32.totalorder 1, %s12
    %p212 = scmp.lt.s32.totalorder %s12, 3
    %p213 = pnand %p211, %p212
    %p214 = pneg %p213
    // Predicated region
    $region9: #{spectral_conv2d_dse_forward.4} parent=5 // pred_check
      _
    $region10: #{spectral_conv2d_dse_forward.4} parent=5 // pred_check_branch
      %216 = sbr.rel (%p213) target = $region12
    $region11: #{spectral_conv2d_dse_forward.4} parent=5 // pred_region
      %s217 = ssub.s32 %s12, 1
      // Predicated region
      $region13: #{spectral_conv2d_dse_forward.4} parent=11 // pred_check
        %p218 = pneg %p115
      $region14: #{spectral_conv2d_dse_forward.4} parent=11 // pred_check_branch
        %220 = sbr.rel (%p218) target = $region16
      $region15: #{spectral_conv2d_dse_forward.4} parent=11 // pred_region
        %p221 = scmp.lt.s32.totalorder %s23, 0
        %s222 = scalar_select %p221, %s23, 0
        %p223 = scmp.lt.s32.totalorder %s24, 0
        %s224 = scalar_select %p223, %s24, 0
        %s225 = sadd.s32 %s224, %s222
        %s226 = smul.addr %s225, 2
        %s227 = scalar_lea.vmem %s2, %s226
      $region16: #{spectral_conv2d_dse_forward.4} parent=11 // pred_fallthru
        _
      // Predicated region
      $region17: #{spectral_conv2d_dse_forward.4} parent=11 // pred_check
        %p228 = pneg %p143
      $region18: #{spectral_conv2d_dse_forward.4} parent=11 // pred_check_branch
        %230 = sbr.rel (%p228) target = $region20
      $region19: #{spectral_conv2d_dse_forward.4} parent=11 // pred_region
        %p231 = scmp.lt.s32.totalorder %s23, 0
        %s232 = scalar_select %p231, %s23, 0
        %p233 = scmp.lt.s32.totalorder %s24, 0
        %s234 = scalar_select %p233, %s24, 0
        %s235 = sadd.s32 %s234, %s232
        %s236 = smul.addr %s235, 2
        %s237 = scalar_lea.vmem %s3, %s236
      $region20: #{spectral_conv2d_dse_forward.4} parent=11 // pred_fallthru
        _
    $region12: #{spectral_conv2d_dse_forward.4} parent=5 // pred_fallthru
      _
    %p238 = scmp.lt.s32.totalorder %s12, 2
    // Predicated region
    $region21: #{spectral_conv2d_dse_forward.4} parent=5 // pred_check
      %p239 = pneg %p238
    $region22: #{spectral_conv2d_dse_forward.4} parent=5 // pred_check_branch
      %241 = sbr.rel (%p239) target = $region24
    $region23: #{spectral_conv2d_dse_forward.4} parent=5 // pred_region
      // Predicated region
      $region25: #{spectral_conv2d_dse_forward.4} parent=23 // pred_check
        %p242 = pneg %p53
      $region26: #{spectral_conv2d_dse_forward.4} parent=23 // pred_check_branch
        %244 = sbr.rel (%p242) target = $region28
      $region27: #{spectral_conv2d_dse_forward.4} parent=23 // pred_region
        %p245 = scmp.lt.s32.totalorder %s19, 1
        %s246 = scalar_select %p245, %s19, 1
        %p247 = scmp.lt.s32.totalorder %s21, 0
        %s248 = scalar_select %p247, %s21, 0
        %s249 = sadd.s32 %s248, %s246
        %s250 = smul.addr %s249, 2
        %s251 = scalar_lea.vmem %s0, %s250
      $region28: #{spectral_conv2d_dse_forward.4} parent=23 // pred_fallthru
        _
      // Predicated region
      $region29: #{spectral_conv2d_dse_forward.4} parent=23 // pred_check
        %p252 = pneg %p81
      $region30: #{spectral_conv2d_dse_forward.4} parent=23 // pred_check_branch
        %254 = sbr.rel (%p252) target = $region32
      $region31: #{spectral_conv2d_dse_forward.4} parent=23 // pred_region
        %p255 = scmp.lt.s32.totalorder %s19, 1
        %s256 = scalar_select %p255, %s19, 1
        %p257 = scmp.lt.s32.totalorder %s21, 0
        %s258 = scalar_select %p257, %s21, 0
        %s259 = sadd.s32 %s258, %s256
        %s260 = smul.addr %s259, 2
        %s261 = scalar_lea.vmem %s1, %s260
      $region32: #{spectral_conv2d_dse_forward.4} parent=23 // pred_fallthru
        _
    $region24: #{spectral_conv2d_dse_forward.4} parent=5 // pred_fallthru
      _
    %p262 = scmp.le.s32.totalorder 1, %s12
    %p263 = scmp.lt.s32.totalorder %s12, 3
    %p264 = pnand %p262, %p263
    %p265 = pneg %p264
    // Predicated region
    $region33: #{spectral_conv2d_dse_forward.4} parent=5 // pred_check
      _
    $region34: #{spectral_conv2d_dse_forward.4} parent=5 // pred_check_branch
      %267 = sbr.rel (%p264) target = $region36
    $region35: #{spectral_conv2d_dse_forward.4} parent=5 // pred_region
      %s268 = ssub.s32 %s12, 1
      %p269 = scmp.lt.s32.totalorder %s22, 1
      %s270 = scalar_select %p269, %s22, 1
      %p271 = scmp.lt.s32.totalorder %s24, 0
      %s272 = scalar_select %p271, %s24, 0
      %s273 = sadd.s32 %s272, %s270
      %s274 = smul.addr %s273, 2
      %s275 = scalar_lea.vmem %s0, %s274
      %p276 = pneg %p59
      %p277 = pneg %p56
      %p278 = scmp.lt.s32.totalorder %s22, 1
      %s279 = scalar_select %p278, %s22, 1
      %p280 = scmp.lt.s32.totalorder %s24, 0
      %s281 = scalar_select %p280, %s24, 0
      %s282 = sadd.s32 %s281, %s279
      %s283 = smul.addr %s282, 2
      %s284 = scalar_lea.vmem %s1, %s283
      %p285 = pneg %p87
      %p286 = pneg %p84
      %p287 = scmp.lt.s32.totalorder %s23, 0
      %s288 = scalar_select %p287, %s23, 0
      %p289 = scmp.lt.s32.totalorder %s24, 0
      %s290 = scalar_select %p289, %s24, 0
      %s291 = sadd.s32 %s290, %s288
      %s292 = smul.addr %s291, 2
      %s293 = scalar_lea.vmem %s2, %s292
      %p294 = pneg %p115
      %p295 = pneg %p112
      %p296 = scmp.lt.s32.totalorder %s23, 0
      %s297 = scalar_select %p296, %s23, 0
      %p298 = scmp.lt.s32.totalorder %s24, 0
      %s299 = scalar_select %p298, %s24, 0
      %s300 = sadd.s32 %s299, %s297
      %s301 = smul.addr %s300, 2
      %s302 = scalar_lea.vmem %s3, %s301
      %p303 = pneg %p143
      %p304 = pneg %p140
      %p305 = pneg %p173
      %p306 = pneg %p170
      %p307 = scmp.lt.s32.totalorder %s22, 1
      %s308 = scalar_select %p307, %s22, 1
      %p309 = scmp.lt.s32.totalorder %s23, 0
      %s310 = scalar_select %p309, %s23, 0
      %p311 = scmp.lt.s32.totalorder %s24, 0
      %s312 = scalar_select %p311, %s24, 0
      %s313 = sadd.s32 %s312, %s310
      %s314 = sadd.s32 %s313, %s308
      %s315 = smul.addr %s314, 4
      %s316 = scalar_lea.vmem %s4, %s315
      %p317 = pneg %p203
      %p318 = pneg %p200
      %p319 = scmp.lt.s32.totalorder %s22, 1
      %s320 = scalar_select %p319, %s22, 1
      %p321 = scmp.lt.s32.totalorder %s23, 0
      %s322 = scalar_select %p321, %s23, 0
      %p323 = scmp.lt.s32.totalorder %s24, 0
      %s324 = scalar_select %p323, %s24, 0
      %s325 = sadd.s32 %s324, %s322
      %s326 = sadd.s32 %s325, %s320
      %s327 = smul.addr %s326, 4
      %s328 = scalar_lea.vmem %s5, %s327
      %p329 = scmp.lt.s32.totalorder %s22, 1
      %s330 = scalar_select %p329, %s22, 1
      %p331 = scmp.lt.s32.totalorder %s24, 0
      %s332 = scalar_select %p331, %s24, 0
      %s333 = sadd.s32 %s332, %s330
      %s334 = smul.addr %s333, 2
      %s335 = scalar_lea.vmem %s0, %s334
      %p336 = scmp.lt.s32.totalorder %s22, 1
      %s337 = scalar_select %p336, %s22, 1
      %p338 = scmp.lt.s32.totalorder %s24, 0
      %s339 = scalar_select %p338, %s24, 0
      %s340 = sadd.s32 %s339, %s337
      %s341 = smul.addr %s340, 2
      %s342 = scalar_lea.vmem %s1, %s341
      %p343 = scmp.lt.s32.totalorder %s23, 0
      %s344 = scalar_select %p343, %s23, 0
      %p345 = scmp.lt.s32.totalorder %s24, 0
      %s346 = scalar_select %p345, %s24, 0
      %s347 = sadd.s32 %s346, %s344
      %s348 = smul.addr %s347, 2
      %s349 = scalar_lea.vmem %s2, %s348
      %p350 = scmp.lt.s32.totalorder %s23, 0
      %s351 = scalar_select %p350, %s23, 0
      %p352 = scmp.lt.s32.totalorder %s24, 0
      %s353 = scalar_select %p352, %s24, 0
      %s354 = sadd.s32 %s353, %s351
      %s355 = smul.addr %s354, 2
      %s356 = scalar_lea.vmem %s3, %s355
      %p357 = scmp.lt.s32.totalorder %s22, 1
      %s358 = scalar_select %p357, %s22, 1
      %p359 = scmp.lt.s32.totalorder %s23, 0
      %s360 = scalar_select %p359, %s23, 0
      %p361 = scmp.lt.s32.totalorder %s24, 0
      %s362 = scalar_select %p361, %s24, 0
      %s363 = sadd.s32 %s362, %s360
      %s364 = sadd.s32 %s363, %s358
      %s365 = smul.addr %s364, 4
      %s366 = scalar_lea.vmem %s4, %s365
      %p367 = scmp.lt.s32.totalorder %s22, 1
      %s368 = scalar_select %p367, %s22, 1
      %p369 = scmp.lt.s32.totalorder %s23, 0
      %s370 = scalar_select %p369, %s23, 0
      %p371 = scmp.lt.s32.totalorder %s24, 0
      %s372 = scalar_select %p371, %s24, 0
      %s373 = sadd.s32 %s372, %s370
      %s374 = sadd.s32 %s373, %s368
      %s375 = smul.addr %s374, 4
      %s376 = scalar_lea.vmem %s5, %s375
      %v377 = vld [vmem:[%s335] sm:$0x1]
      %v378 = vunpack.c.l.bf16 %v377
      %v379 = vld [vmem:[%s342] sm:$0x1]
      %v380 = vunpack.c.l.bf16 %v379
      %v381 = vld [vmem:[%s349] sm:$0x3]
      %v382 = vunpack.c.l.bf16 %v381
      %v383 = vld [vmem:[%s356] sm:$0x3]
      %v384 = vunpack.c.l.bf16 %v383
      %v385 = vlaneseq
      %v386 = vshrl.u32 %v385, 7
      %v387 = vsub.s32 0, %v386
      %v388 = vrot.slane %v378, %v387
      %v389 = vmul.f32 %v388, %v382
      %v390 = vlaneseq
      %v391 = vshrl.u32 %v390, 7
      %v392 = vsub.s32 0, %v391
      %v393 = vrot.slane %v380, %v392
      %v394 = vmul.f32 %v393, %v384
      %v395 = vsub.f32 %v389, %v394
      %v396 = vadd.f32 %v395, 0.0
      %v397 = vmul.f32 %v388, %v384
      %v398 = vmul.f32 %v393, %v382
      %v399 = vadd.f32 %v397, %v398
      %v400 = vadd.f32 %v399, 0.0
      %s401 = scalar_lea.vmem %s349, 2
      %v402 = vld [vmem:[%s401] sm:$0x3]
      %v403 = vunpack.c.l.bf16 %v402
      %s404 = scalar_lea.vmem %s356, 2
      %v405 = vld [vmem:[%s404] sm:$0x3]
      %v406 = vunpack.c.l.bf16 %v405
      %v407 = vlaneseq
      %v408 = vshrl.u32 %v407, 7
      %v409 = vsub.s32 1, %v408
      %v410 = vrot.slane %v378, %v409
      %v411 = vmul.f32 %v410, %v403
      %v412 = vlaneseq
      %v413 = vshrl.u32 %v412, 7
      %v414 = vsub.s32 1, %v413
      %v415 = vrot.slane %v380, %v414
      %v416 = vmul.f32 %v415, %v406
      %v417 = vsub.f32 %v411, %v416
      %v418 = vadd.f32 %v396, %v417
      %v419 = vmul.f32 %v410, %v406
      %v420 = vmul.f32 %v415, %v403
      %v421 = vadd.f32 %v419, %v420
      %v422 = vadd.f32 %v400, %v421
      %v423 = vld [vmem:[%s335] sm:$0x2]
      %v424 = vunpack.c.l.bf16 %v423
      %v425 = vld [vmem:[%s342] sm:$0x2]
      %v426 = vunpack.c.l.bf16 %v425
      %s427 = scalar_lea.vmem %s349, 4
      %v428 = vld [vmem:[%s427] sm:$0x3]
      %v429 = vunpack.c.l.bf16 %v428
      %s430 = scalar_lea.vmem %s356, 4
      %v431 = vld [vmem:[%s430] sm:$0x3]
      %v432 = vunpack.c.l.bf16 %v431
      %v433 = vlaneseq
      %v434 = vshrl.u32 %v433, 7
      %v435 = vsub.s32 2, %v434
      %v436 = vrot.slane %v424, %v435
      %v437 = vmul.f32 %v436, %v429
      %v438 = vlaneseq
      %v439 = vshrl.u32 %v438, 7
      %v440 = vsub.s32 2, %v439
      %v441 = vrot.slane %v426, %v440
      %v442 = vmul.f32 %v441, %v432
      %v443 = vsub.f32 %v437, %v442
      %v444 = vadd.f32 %v418, %v443
      %v445 = vmul.f32 %v436, %v432
      %v446 = vmul.f32 %v441, %v429
      %v447 = vadd.f32 %v445, %v446
      %v448 = vadd.f32 %v422, %v447
      %s449 = scalar_lea.vmem %s349, 6
      %v450 = vld [vmem:[%s449] sm:$0x3]
      %v451 = vunpack.c.l.bf16 %v450
      %s452 = scalar_lea.vmem %s356, 6
      %v453 = vld [vmem:[%s452] sm:$0x3]
      %v454 = vunpack.c.l.bf16 %v453
      %v455 = vlaneseq
      %v456 = vshrl.u32 %v455, 7
      %v457 = vsub.s32 3, %v456
      %v458 = vrot.slane %v424, %v457
      %v459 = vmul.f32 %v458, %v451
      %v460 = vlaneseq
      %v461 = vshrl.u32 %v460, 7
      %v462 = vsub.s32 3, %v461
      %v463 = vrot.slane %v426, %v462
      %v464 = vmul.f32 %v463, %v454
      %v465 = vsub.f32 %v459, %v464
      %v466 = vadd.f32 %v444, %v465
      %v467 = vmul.f32 %v458, %v454
      %v468 = vmul.f32 %v463, %v451
      %v469 = vadd.f32 %v467, %v468
      %v470 = vadd.f32 %v448, %v469
      %471 = vst [vmem:[%s366] sm:$0xf] %v466
      %472 = vst [vmem:[%s376] sm:$0xf] %v470
      %p473 = scmp.lt.s32.totalorder %s22, 1
      %s474 = scalar_select %p473, %s22, 1
      %p475 = scmp.lt.s32.totalorder %s23, 0
      %s476 = scalar_select %p475, %s23, 0
      %p477 = scmp.lt.s32.totalorder %s24, 0
      %s478 = scalar_select %p477, %s24, 0
      %s479 = sadd.s32 %s478, %s476
      %s480 = sadd.s32 %s479, %s474
      %s481 = smul.addr %s480, 4
      %s482 = scalar_lea.vmem %s4, %s481
      %p483 = scmp.lt.s32.totalorder %s22, 1
      %s484 = scalar_select %p483, %s22, 1
      %p485 = scmp.lt.s32.totalorder %s23, 0
      %s486 = scalar_select %p485, %s23, 0
      %p487 = scmp.lt.s32.totalorder %s24, 0
      %s488 = scalar_select %p487, %s24, 0
      %s489 = sadd.s32 %s488, %s486
      %s490 = sadd.s32 %s489, %s484
      %s491 = smul.addr %s490, 4
      %s492 = scalar_lea.vmem %s5, %s491
      // Predicated region
      $region37: #{spectral_conv2d_dse_forward.4} parent=35 // pred_check
        %p493 = pneg %p170
      $region38: #{spectral_conv2d_dse_forward.4} parent=35 // pred_check_branch
        %495 = sbr.rel (%p493) target = $region40
      $region39: #{spectral_conv2d_dse_forward.4} parent=35 // pred_region
        _
      $region40: #{spectral_conv2d_dse_forward.4} parent=35 // pred_fallthru
        _
      // Predicated region
      $region41: #{spectral_conv2d_dse_forward.4} parent=35 // pred_check
        %p496 = pneg %p200
      $region42: #{spectral_conv2d_dse_forward.4} parent=35 // pred_check_branch
        %498 = sbr.rel (%p496) target = $region44
      $region43: #{spectral_conv2d_dse_forward.4} parent=35 // pred_region
        _
      $region44: #{spectral_conv2d_dse_forward.4} parent=35 // pred_fallthru
        _
    $region36: #{spectral_conv2d_dse_forward.4} parent=5 // pred_fallthru
      _
    %p499 = scmp.le.s32.totalorder 2, %s12
    // Predicated region
    $region45: #{spectral_conv2d_dse_forward.4} parent=5 // pred_check
      %p500 = pneg %p499
    $region46: #{spectral_conv2d_dse_forward.4} parent=5 // pred_check_branch
      %502 = sbr.rel (%p500) target = $region48
    $region47: #{spectral_conv2d_dse_forward.4} parent=5 // pred_region
      %s503 = ssub.s32 %s12, 2
      // Predicated region
      $region49: #{spectral_conv2d_dse_forward.4} parent=47 // pred_check
        %p504 = pneg %p176
      $region50: #{spectral_conv2d_dse_forward.4} parent=47 // pred_check_branch
        %506 = sbr.rel (%p504) target = $region52
      $region51: #{spectral_conv2d_dse_forward.4} parent=47 // pred_region
        %p507 = scmp.lt.s32.totalorder %s25, 1
        %s508 = scalar_select %p507, %s25, 1
        %p509 = scmp.lt.s32.totalorder %s26, 0
        %s510 = scalar_select %p509, %s26, 0
        %p511 = scmp.lt.s32.totalorder %s27, 0
        %s512 = scalar_select %p511, %s27, 0
        %s513 = sadd.s32 %s512, %s510
        %s514 = sadd.s32 %s513, %s508
        %s515 = smul.addr %s514, 4
        %s516 = scalar_lea.vmem %s4, %s515
      $region52: #{spectral_conv2d_dse_forward.4} parent=47 // pred_fallthru
        _
      // Predicated region
      $region53: #{spectral_conv2d_dse_forward.4} parent=47 // pred_check
        %p517 = pneg %p206
      $region54: #{spectral_conv2d_dse_forward.4} parent=47 // pred_check_branch
        %519 = sbr.rel (%p517) target = $region56
      $region55: #{spectral_conv2d_dse_forward.4} parent=47 // pred_region
        %p520 = scmp.lt.s32.totalorder %s25, 1
        %s521 = scalar_select %p520, %s25, 1
        %p522 = scmp.lt.s32.totalorder %s26, 0
        %s523 = scalar_select %p522, %s26, 0
        %p524 = scmp.lt.s32.totalorder %s27, 0
        %s525 = scalar_select %p524, %s27, 0
        %s526 = sadd.s32 %s525, %s523
        %s527 = sadd.s32 %s526, %s521
        %s528 = smul.addr %s527, 4
        %s529 = scalar_lea.vmem %s5, %s528
      $region56: #{spectral_conv2d_dse_forward.4} parent=47 // pred_fallthru
        _
    $region48: #{spectral_conv2d_dse_forward.4} parent=5 // pred_fallthru
      _
  $region6: #{spectral_conv2d_dse_forward.4} parent=0 // loop_footer
    %s16 = sadd.s32 1, %s12
  $region7: #{spectral_conv2d_dse_forward.4} parent=0 // loop_footer_branch
    %11 = sbr.rel target = $region3
  $region8: #{spectral_conv2d_dse_forward.4} parent=0 // loop_exit
    _

</llo_original>
